<compile_context>
chip_gen: v7x
topology: tpu7x:2x2x1
jax: 0.10.0
libtpu: 0.0.40
codegen_flags: <defaults>
</compile_context>

<pallas_src>
import jax
import jax.numpy as jnp
from jax.experimental import pallas as pl
from jax.experimental.pallas import tpu as pltpu


def _f32(v):
    return v if v.dtype == jnp.float32 else v.astype(jnp.float32)


def _mp_kernel(h_ref, edge_ref, adj_ref,
               waT_ref, wbT_ref, wcT_ref, bw_ref,
               wirT_ref, wizT_ref, winT_ref,
               whrT_ref, whzT_ref, whnT_ref,
               br_ref, bz_ref, bni_ref, bnh_ref,
               out_ref):
    # h_ref:    (1, N, F)      resident per batch element
    # edge_ref: (1, 1, BJ, E)  one target node i, BJ source nodes j
    # adj_ref:  (1, 1, BJ, 1)
    # out_ref:  (1, 1, BJ, E)
    i = pl.program_id(1)
    j = pl.program_id(2)
    bj = edge_ref.shape[2]
    f32 = jnp.float32

    # --- gather node features ------------------------------------------------
    h_i = _f32(h_ref[0, pl.ds(i, 1), :])                      # (1,  F)
    j0 = j * bj
    if bj % 8 == 0:                                           # static hint
        j0 = pl.multiple_of(j0, 8)
    h_j = _f32(h_ref[0, pl.ds(j0, bj), :])                    # (BJ, F)

    e = _f32(edge_ref[0, 0])                                  # (BJ, E)
    a = _f32(adj_ref[0, 0])                                   # (BJ, 1)

    # --- Linear over [h_j | edge | h_i] (split matmuls, f32 MXU accum) -------
    ti = jnp.dot(h_i, wcT_ref[...], preferred_element_type=f32)   # (1,  E)
    tj = jnp.dot(h_j, waT_ref[...], preferred_element_type=f32)   # (BJ, E)
    te = jnp.dot(e,   wbT_ref[...], preferred_element_type=f32)   # (BJ, E)
    m = (ti + tj + te + bw_ref[...]) * a                          # (BJ, E)

    # --- GRUCell(input=m, hidden=edge) ---------------------------------------
    gr = (jnp.dot(m, wirT_ref[...], preferred_element_type=f32)
          + jnp.dot(e, whrT_ref[...], preferred_element_type=f32)
          + br_ref[...])
    gz = (jnp.dot(m, wizT_ref[...], preferred_element_type=f32)
          + jnp.dot(e, whzT_ref[...], preferred_element_type=f32)
          + bz_ref[...])
    r = jax.nn.sigmoid(gr)
    z = jax.nn.sigmoid(gz)
    gn = (jnp.dot(m, winT_ref[...], preferred_element_type=f32) + bni_ref[...]
          + r * (jnp.dot(e, whnT_ref[...], preferred_element_type=f32)
                 + bnh_ref[...]))
    n = jnp.tanh(gn)
    hn = (1.0 - z) * n + z * e

    # --- SiLU -----------------------------------------------------------------
    out = hn * jax.nn.sigmoid(hn)
    out_ref[0, 0] = out.astype(out_ref.dtype)


def _pick_bj(n_nodes: int) -> int:
    """Rows of the (BJ, E) slab per grid step.

    Must be a multiple of 8 or equal to N (BlockSpec sublane rule). Capped at
    1024 rows so the f32 (rows, E) intermediates of the fused Linear+GRU stay
    comfortably inside scoped VMEM on every generation (v5e 16 MiB default,
    v6e 32 MiB, v7x 64 MiB physical).
    """
    target = 1024
    if n_nodes <= target or n_nodes % 8 != 0:
        return n_nodes
    bj = target
    while bj >= 8:
        if n_nodes % bj == 0:
            return bj
        bj -= 8
    return n_nodes


def message_passing(h, edge, adj, params):
    """Pallas equivalent of MessagePassing.forward(h, edge, adj)."""
    B, N, F = h.shape
    E = edge.shape[-1]
    assert edge.shape == (B, N, N, E)
    assert adj.shape == (B, N, N)

    W, bW = params["W"], params["bW"]            # (E, 2F+E), (E,)
    W_ih, b_ih = params["W_ih"], params["b_ih"]  # (3E, E), (3E,)
    W_hh, b_hh = params["W_hh"], params["b_hh"]  # (3E, E), (3E,)

    # Split/transpose weights once at trace time (columns: [h_j | edge | h_i]).
    waT = W[:, :F].T                     # (F, E)  applied to h[b, j]
    wbT = W[:, F:F + E].T                # (E, E)  applied to edge
    wcT = W[:, F + E:].T                 # (F, E)  applied to h[b, i]
    bw = bW.reshape(1, E)

    wirT, wizT, winT = W_ih[:E].T, W_ih[E:2 * E].T, W_ih[2 * E:].T   # (E, E)
    whrT, whzT, whnT = W_hh[:E].T, W_hh[E:2 * E].T, W_hh[2 * E:].T   # (E, E)
    br = (b_ih[:E] + b_hh[:E]).reshape(1, E)
    bz = (b_ih[E:2 * E] + b_hh[E:2 * E]).reshape(1, E)
    bni = b_ih[2 * E:].reshape(1, E)
    bnh = b_hh[2 * E:].reshape(1, E)

    adj4 = adj.reshape(B, N, N, 1).astype(edge.dtype)

    BJ = _pick_bj(N)
    grid = (B, N, N // BJ)

    def _const2d(shape):
        return pl.BlockSpec(shape, lambda b, i, j: (0, 0))

    in_specs = [
        pl.BlockSpec((1, N, F), lambda b, i, j: (b, 0, 0)),          # h (resident/batch)
        pl.BlockSpec((1, 1, BJ, E), lambda b, i, j: (b, i, j, 0)),   # edge slab
        pl.BlockSpec((1, 1, BJ, 1), lambda b, i, j: (b, i, j, 0)),   # adj slab
        _const2d((F, E)), _const2d((E, E)), _const2d((F, E)), _const2d((1, E)),
        _const2d((E, E)), _const2d((E, E)), _const2d((E, E)),
        _const2d((E, E)), _const2d((E, E)), _const2d((E, E)),
        _const2d((1, E)), _const2d((1, E)), _const2d((1, E)), _const2d((1, E)),
    ]
    out_specs = pl.BlockSpec((1, 1, BJ, E), lambda b, i, j: (b, i, j, 0))

    fn = pl.pallas_call(
        _mp_kernel,
        out_shape=jax.ShapeDtypeStruct((B, N, N, E), edge.dtype),
        grid_spec=pltpu.PrefetchScalarGridSpec(
            num_scalar_prefetch=0,
            grid=grid,
            in_specs=in_specs,
            out_specs=out_specs,
        ),
        compiler_params=pltpu.CompilerParams(
            dimension_semantics=("parallel", "parallel", "parallel"),
        ),
    )
    return fn(h, edge, adj4,
              waT, wbT, wcT, bw,
              wirT, wizT, winT, whrT, whzT, whnT,
              br, bz, bni, bnh)


def message_passing_ref(h, edge, adj, p):
    """Literal JAX translation of the PyTorch forward (for correctness check)."""
    B, N, F = h.shape
    E = edge.shape[-1]
    h1 = jnp.broadcast_to(h[:, None, :, :], (B, N, N, F))   # h1[b,i,j] = h[b,j]
    h2 = jnp.broadcast_to(h[:, :, None, :], (B, N, N, F))   # h2[b,i,j] = h[b,i]
    cat = jnp.concatenate([h1, edge, h2], axis=-1)
    m = (jnp.einsum("bijk,ek->bije", cat, p["W"]) + p["bW"]) * adj[..., None]
    x = m.reshape(-1, E)
    hid = edge.reshape(-1, E)
    gi = x @ p["W_ih"].T + p["b_ih"]
    gh = hid @ p["W_hh"].T + p["b_hh"]
    r = jax.nn.sigmoid(gi[:, :E] + gh[:, :E])
    z = jax.nn.sigmoid(gi[:, E:2 * E] + gh[:, E:2 * E])
    n = jnp.tanh(gi[:, 2 * E:] + r * gh[:, 2 * E:])
    hn = (1.0 - z) * n + z * hid
    out = hn * jax.nn.sigmoid(hn)
    return out.reshape(B, N, N, E)


if __name__ == "__main__":
    B, N = 2, 8           # batch, nodes
    F, E = 16, 32         # in_feature, edge_feature

    key = jax.random.PRNGKey(0)
    ks = jax.random.split(key, 9)
    s_w = 1.0 / jnp.sqrt(2 * F + E)
    s_g = 1.0 / jnp.sqrt(E)
    params = {
        "W":    jax.random.normal(ks[0], (E, 2 * F + E), jnp.float32) * s_w,
        "bW":   jax.random.normal(ks[1], (E,), jnp.float32) * s_w,
        "W_ih": jax.random.normal(ks[2], (3 * E, E), jnp.float32) * s_g,
        "b_ih": jax.random.normal(ks[3], (3 * E,), jnp.float32) * s_g,
        "W_hh": jax.random.normal(ks[4], (3 * E, E), jnp.float32) * s_g,
        "b_hh": jax.random.normal(ks[5], (3 * E,), jnp.float32) * s_g,
    }
    h = jax.random.normal(ks[6], (B, N, F), jnp.float32)
    edge = jax.random.normal(ks[7], (B, N, N, E), jnp.float32)
    adj = (jax.random.uniform(ks[8], (B, N, N)) > 0.4).astype(jnp.float32)

    out = message_passing(h, edge, adj, params)
    out = jax.block_until_ready(out)

    ref = message_passing_ref(h, edge, adj, params)
    assert out.shape == (B, N, N, E)
    assert jnp.allclose(out, ref, atol=1e-3, rtol=1e-3), float(
        jnp.max(jnp.abs(out - ref)))

    print("KERNEL_OK")
</pallas_src>

<mosaic_0001>
module attributes {stable_mosaic.version = 11 : i64} {
  func.func @_mp_kernel(%arg0: i32, %arg1: i32, %arg2: i32, %arg3: memref<1x8x16xf32, #tpu.memory_space<vmem>>, %arg4: memref<1x1x8x32xf32, #tpu.memory_space<vmem>>, %arg5: memref<1x1x8x1xf32, #tpu.memory_space<vmem>>, %arg6: memref<16x32xf32, #tpu.memory_space<vmem>>, %arg7: memref<32x32xf32, #tpu.memory_space<vmem>>, %arg8: memref<16x32xf32, #tpu.memory_space<vmem>>, %arg9: memref<1x32xf32, #tpu.memory_space<vmem>>, %arg10: memref<32x32xf32, #tpu.memory_space<vmem>>, %arg11: memref<32x32xf32, #tpu.memory_space<vmem>>, %arg12: memref<32x32xf32, #tpu.memory_space<vmem>>, %arg13: memref<32x32xf32, #tpu.memory_space<vmem>>, %arg14: memref<32x32xf32, #tpu.memory_space<vmem>>, %arg15: memref<32x32xf32, #tpu.memory_space<vmem>>, %arg16: memref<1x32xf32, #tpu.memory_space<vmem>>, %arg17: memref<1x32xf32, #tpu.memory_space<vmem>>, %arg18: memref<1x32xf32, #tpu.memory_space<vmem>>, %arg19: memref<1x32xf32, #tpu.memory_space<vmem>>, %arg20: memref<1x1x8x32xf32, #tpu.memory_space<vmem>>) attributes {dimension_semantics = [#tpu.dimension_semantics<parallel>, #tpu.dimension_semantics<parallel>, #tpu.dimension_semantics<parallel>], iteration_bounds = array<i64: 2, 8, 1>, scalar_prefetch = 0 : i64, scratch_operands = 0 : i64, tpu.core_type = #tpu.core_type<tc>, window_params = [{transform_indices = @transform_0, window_bounds = array<i64: 1, 8, 16>}, {transform_indices = @transform_1, window_bounds = array<i64: 1, 1, 8, 32>}, {transform_indices = @transform_2, window_bounds = array<i64: 1, 1, 8, 1>}, {pipeline_mode = #tpu.pipeline_mode<synchronous>, transform_indices = @transform_3, window_bounds = array<i64: 16, 32>}, {pipeline_mode = #tpu.pipeline_mode<synchronous>, transform_indices = @transform_4, window_bounds = array<i64: 32, 32>}, {pipeline_mode = #tpu.pipeline_mode<synchronous>, transform_indices = @transform_5, window_bounds = array<i64: 16, 32>}, {pipeline_mode = #tpu.pipeline_mode<synchronous>, transform_indices = @transform_6, window_bounds = array<i64: 1, 32>}, {pipeline_mode = #tpu.pipeline_mode<synchronous>, transform_indices = @transform_7, window_bounds = array<i64: 32, 32>}, {pipeline_mode = #tpu.pipeline_mode<synchronous>, transform_indices = @transform_8, window_bounds = array<i64: 32, 32>}, {pipeline_mode = #tpu.pipeline_mode<synchronous>, transform_indices = @transform_9, window_bounds = array<i64: 32, 32>}, {pipeline_mode = #tpu.pipeline_mode<synchronous>, transform_indices = @transform_10, window_bounds = array<i64: 32, 32>}, {pipeline_mode = #tpu.pipeline_mode<synchronous>, transform_indices = @transform_11, window_bounds = array<i64: 32, 32>}, {pipeline_mode = #tpu.pipeline_mode<synchronous>, transform_indices = @transform_12, window_bounds = array<i64: 32, 32>}, {pipeline_mode = #tpu.pipeline_mode<synchronous>, transform_indices = @transform_13, window_bounds = array<i64: 1, 32>}, {pipeline_mode = #tpu.pipeline_mode<synchronous>, transform_indices = @transform_14, window_bounds = array<i64: 1, 32>}, {pipeline_mode = #tpu.pipeline_mode<synchronous>, transform_indices = @transform_15, window_bounds = array<i64: 1, 32>}, {pipeline_mode = #tpu.pipeline_mode<synchronous>, transform_indices = @transform_16, window_bounds = array<i64: 1, 32>}, {transform_indices = @transform_17, window_bounds = array<i64: 1, 1, 8, 32>}]} {
    %c0 = arith.constant 0 : index
    %0 = arith.index_cast %arg1 : i32 to index
    %c0_0 = arith.constant 0 : index
    %1 = vector.load %arg3[%c0, %0, %c0_0] : memref<1x8x16xf32, #tpu.memory_space<vmem>>, vector<1x1x16xf32>
    %2 = vector.shape_cast %1 : vector<1x1x16xf32> to vector<1x16xf32>
    %c8_i32 = arith.constant 8 : i32
    %3 = arith.muli %arg2, %c8_i32 : i32
    %4 = tpu.assume_multiple %3, 8 : i32
    %c0_1 = arith.constant 0 : index
    %5 = arith.index_cast %4 : i32 to index
    %c0_2 = arith.constant 0 : index
    %6 = vector.load %arg3[%c0_1, %5, %c0_2] : memref<1x8x16xf32, #tpu.memory_space<vmem>>, vector<1x8x16xf32>
    %7 = vector.shape_cast %6 : vector<1x8x16xf32> to vector<8x16xf32>
    %c0_3 = arith.constant 0 : index
    %c0_4 = arith.constant 0 : index
    %c0_5 = arith.constant 0 : index
    %c0_6 = arith.constant 0 : index
    %8 = vector.load %arg4[%c0_3, %c0_4, %c0_5, %c0_6] : memref<1x1x8x32xf32, #tpu.memory_space<vmem>>, vector<1x1x8x32xf32>
    %9 = vector.shape_cast %8 : vector<1x1x8x32xf32> to vector<8x32xf32>
    %c0_7 = arith.constant 0 : index
    %c0_8 = arith.constant 0 : index
    %c0_9 = arith.constant 0 : index
    %c0_10 = arith.constant 0 : index
    %10 = vector.load %arg5[%c0_7, %c0_8, %c0_9, %c0_10] : memref<1x1x8x1xf32, #tpu.memory_space<vmem>>, vector<1x1x8x1xf32>
    %11 = vector.shape_cast %10 : vector<1x1x8x1xf32> to vector<8x1xf32>
    %c0_11 = arith.constant 0 : index
    %c0_12 = arith.constant 0 : index
    %12 = vector.load %arg8[%c0_11, %c0_12] : memref<16x32xf32, #tpu.memory_space<vmem>>, vector<16x32xf32>
    %cst = arith.constant dense<0.000000e+00> : vector<1x32xf32>
    %13 = tpu.matmul %2, %12, %cst {dimension_numbers = #tpu.dot_dimension_numbers<[1], [0], [0], [1], [0, 0, 1, 1], [], []>} : vector<1x16xf32>, vector<16x32xf32>, vector<1x32xf32> -> vector<1x32xf32>
    %c0_13 = arith.constant 0 : index
    %c0_14 = arith.constant 0 : index
    %14 = vector.load %arg6[%c0_13, %c0_14] : memref<16x32xf32, #tpu.memory_space<vmem>>, vector<16x32xf32>
    %cst_15 = arith.constant dense<0.000000e+00> : vector<8x32xf32>
    %15 = tpu.matmul %7, %14, %cst_15 {dimension_numbers = #tpu.dot_dimension_numbers<[1], [0], [0], [1], [0, 0, 1, 1], [], []>} : vector<8x16xf32>, vector<16x32xf32>, vector<8x32xf32> -> vector<8x32xf32>
    %c0_16 = arith.constant 0 : index
    %c0_17 = arith.constant 0 : index
    %16 = vector.load %arg7[%c0_16, %c0_17] : memref<32x32xf32, #tpu.memory_space<vmem>>, vector<32x32xf32>
    %cst_18 = arith.constant dense<0.000000e+00> : vector<8x32xf32>
    %17 = tpu.matmul %9, %16, %cst_18 {dimension_numbers = #tpu.dot_dimension_numbers<[1], [0], [0], [1], [0, 0, 1, 1], [], []>} : vector<8x32xf32>, vector<32x32xf32>, vector<8x32xf32> -> vector<8x32xf32>
    %18 = vector.broadcast %13 : vector<1x32xf32> to vector<8x32xf32>
    %19 = arith.addf %18, %15 : vector<8x32xf32>
    %20 = arith.addf %19, %17 : vector<8x32xf32>
    %c0_19 = arith.constant 0 : index
    %c0_20 = arith.constant 0 : index
    %21 = vector.load %arg9[%c0_19, %c0_20] : memref<1x32xf32, #tpu.memory_space<vmem>>, vector<1x32xf32>
    %22 = vector.broadcast %21 : vector<1x32xf32> to vector<8x32xf32>
    %23 = arith.addf %20, %22 : vector<8x32xf32>
    %24 = vector.broadcast %11 : vector<8x1xf32> to vector<8x32xf32>
    %25 = arith.mulf %23, %24 : vector<8x32xf32>
    %c0_21 = arith.constant 0 : index
    %c0_22 = arith.constant 0 : index
    %26 = vector.load %arg10[%c0_21, %c0_22] : memref<32x32xf32, #tpu.memory_space<vmem>>, vector<32x32xf32>
    %cst_23 = arith.constant dense<0.000000e+00> : vector<8x32xf32>
    %27 = tpu.matmul %25, %26, %cst_23 {dimension_numbers = #tpu.dot_dimension_numbers<[1], [0], [0], [1], [0, 0, 1, 1], [], []>} : vector<8x32xf32>, vector<32x32xf32>, vector<8x32xf32> -> vector<8x32xf32>
    %c0_24 = arith.constant 0 : index
    %c0_25 = arith.constant 0 : index
    %28 = vector.load %arg13[%c0_24, %c0_25] : memref<32x32xf32, #tpu.memory_space<vmem>>, vector<32x32xf32>
    %cst_26 = arith.constant dense<0.000000e+00> : vector<8x32xf32>
    %29 = tpu.matmul %9, %28, %cst_26 {dimension_numbers = #tpu.dot_dimension_numbers<[1], [0], [0], [1], [0, 0, 1, 1], [], []>} : vector<8x32xf32>, vector<32x32xf32>, vector<8x32xf32> -> vector<8x32xf32>
    %30 = arith.addf %27, %29 : vector<8x32xf32>
    %c0_27 = arith.constant 0 : index
    %c0_28 = arith.constant 0 : index
    %31 = vector.load %arg16[%c0_27, %c0_28] : memref<1x32xf32, #tpu.memory_space<vmem>>, vector<1x32xf32>
    %32 = vector.broadcast %31 : vector<1x32xf32> to vector<8x32xf32>
    %33 = arith.addf %30, %32 : vector<8x32xf32>
    %c0_29 = arith.constant 0 : index
    %c0_30 = arith.constant 0 : index
    %34 = vector.load %arg11[%c0_29, %c0_30] : memref<32x32xf32, #tpu.memory_space<vmem>>, vector<32x32xf32>
    %cst_31 = arith.constant dense<0.000000e+00> : vector<8x32xf32>
    %35 = tpu.matmul %25, %34, %cst_31 {dimension_numbers = #tpu.dot_dimension_numbers<[1], [0], [0], [1], [0, 0, 1, 1], [], []>} : vector<8x32xf32>, vector<32x32xf32>, vector<8x32xf32> -> vector<8x32xf32>
    %c0_32 = arith.constant 0 : index
    %c0_33 = arith.constant 0 : index
    %36 = vector.load %arg14[%c0_32, %c0_33] : memref<32x32xf32, #tpu.memory_space<vmem>>, vector<32x32xf32>
    %cst_34 = arith.constant dense<0.000000e+00> : vector<8x32xf32>
    %37 = tpu.matmul %9, %36, %cst_34 {dimension_numbers = #tpu.dot_dimension_numbers<[1], [0], [0], [1], [0, 0, 1, 1], [], []>} : vector<8x32xf32>, vector<32x32xf32>, vector<8x32xf32> -> vector<8x32xf32>
    %38 = arith.addf %35, %37 : vector<8x32xf32>
    %c0_35 = arith.constant 0 : index
    %c0_36 = arith.constant 0 : index
    %39 = vector.load %arg17[%c0_35, %c0_36] : memref<1x32xf32, #tpu.memory_space<vmem>>, vector<1x32xf32>
    %40 = vector.broadcast %39 : vector<1x32xf32> to vector<8x32xf32>
    %41 = arith.addf %38, %40 : vector<8x32xf32>
    %42 = arith.negf %33 : vector<8x32xf32>
    %43 = math.exp %42 : vector<8x32xf32>
    %cst_37 = arith.constant 1.000000e+00 : f32
    %44 = vector.broadcast %cst_37 : f32 to vector<8x32xf32>
    %45 = arith.addf %44, %43 : vector<8x32xf32>
    %46 = arith.divf %44, %45 : vector<8x32xf32>
    %47 = arith.negf %41 : vector<8x32xf32>
    %48 = math.exp %47 : vector<8x32xf32>
    %cst_38 = arith.constant 1.000000e+00 : f32
    %49 = vector.broadcast %cst_38 : f32 to vector<8x32xf32>
    %50 = arith.addf %49, %48 : vector<8x32xf32>
    %51 = arith.divf %49, %50 : vector<8x32xf32>
    %c0_39 = arith.constant 0 : index
    %c0_40 = arith.constant 0 : index
    %52 = vector.load %arg12[%c0_39, %c0_40] : memref<32x32xf32, #tpu.memory_space<vmem>>, vector<32x32xf32>
    %cst_41 = arith.constant dense<0.000000e+00> : vector<8x32xf32>
    %53 = tpu.matmul %25, %52, %cst_41 {dimension_numbers = #tpu.dot_dimension_numbers<[1], [0], [0], [1], [0, 0, 1, 1], [], []>} : vector<8x32xf32>, vector<32x32xf32>, vector<8x32xf32> -> vector<8x32xf32>
    %c0_42 = arith.constant 0 : index
    %c0_43 = arith.constant 0 : index
    %54 = vector.load %arg18[%c0_42, %c0_43] : memref<1x32xf32, #tpu.memory_space<vmem>>, vector<1x32xf32>
    %55 = vector.broadcast %54 : vector<1x32xf32> to vector<8x32xf32>
    %56 = arith.addf %53, %55 : vector<8x32xf32>
    %c0_44 = arith.constant 0 : index
    %c0_45 = arith.constant 0 : index
    %57 = vector.load %arg15[%c0_44, %c0_45] : memref<32x32xf32, #tpu.memory_space<vmem>>, vector<32x32xf32>
    %cst_46 = arith.constant dense<0.000000e+00> : vector<8x32xf32>
    %58 = tpu.matmul %9, %57, %cst_46 {dimension_numbers = #tpu.dot_dimension_numbers<[1], [0], [0], [1], [0, 0, 1, 1], [], []>} : vector<8x32xf32>, vector<32x32xf32>, vector<8x32xf32> -> vector<8x32xf32>
    %c0_47 = arith.constant 0 : index
    %c0_48 = arith.constant 0 : index
    %59 = vector.load %arg19[%c0_47, %c0_48] : memref<1x32xf32, #tpu.memory_space<vmem>>, vector<1x32xf32>
    %60 = vector.broadcast %59 : vector<1x32xf32> to vector<8x32xf32>
    %61 = arith.addf %58, %60 : vector<8x32xf32>
    %62 = arith.mulf %46, %61 : vector<8x32xf32>
    %63 = arith.addf %56, %62 : vector<8x32xf32>
    %64 = math.tanh %63 : vector<8x32xf32>
    %cst_49 = arith.constant 1.000000e+00 : f32
    %65 = vector.broadcast %cst_49 : f32 to vector<8x32xf32>
    %66 = arith.subf %65, %51 : vector<8x32xf32>
    %67 = arith.mulf %66, %64 : vector<8x32xf32>
    %68 = arith.mulf %51, %9 : vector<8x32xf32>
    %69 = arith.addf %67, %68 : vector<8x32xf32>
    %70 = arith.negf %69 : vector<8x32xf32>
    %71 = math.exp %70 : vector<8x32xf32>
    %cst_50 = arith.constant 1.000000e+00 : f32
    %72 = vector.broadcast %cst_50 : f32 to vector<8x32xf32>
    %73 = arith.addf %72, %71 : vector<8x32xf32>
    %74 = arith.divf %72, %73 : vector<8x32xf32>
    %75 = arith.mulf %69, %74 : vector<8x32xf32>
    %c0_51 = arith.constant 0 : index
    %c0_52 = arith.constant 0 : index
    %c0_53 = arith.constant 0 : index
    %c0_54 = arith.constant 0 : index
    %76 = vector.load %arg20[%c0_51, %c0_52, %c0_53, %c0_54] : memref<1x1x8x32xf32, #tpu.memory_space<vmem>>, vector<1x1x8x32xf32>
    %77 = vector.shape_cast %76 : vector<1x1x8x32xf32> to vector<8x32xf32>
    %78 = vector.shape_cast %75 : vector<8x32xf32> to vector<1x1x8x32xf32>
    tpu.vector_store %arg20[%c0_51, %c0_52, %c0_53, %c0_54], %78 {strides = array<i32>} : memref<1x1x8x32xf32, #tpu.memory_space<vmem>>, vector<1x1x8x32xf32>,
    return
  }
  func.func @transform_0(%arg0: i32, %arg1: i32, %arg2: i32) -> (i32, i32, i32) {
    %c0_i32 = arith.constant 0 : i32
    %c0_i32_0 = arith.constant 0 : i32
    %c0_i32_1 = arith.constant 0 : i32
    return %arg0, %c0_i32, %c0_i32_0 : i32, i32, i32
  }
  func.func @transform_1(%arg0: i32, %arg1: i32, %arg2: i32) -> (i32, i32, i32, i32) {
    %c0_i32 = arith.constant 0 : i32
    %c0_i32_0 = arith.constant 0 : i32
    return %arg0, %arg1, %arg2, %c0_i32 : i32, i32, i32, i32
  }
  func.func @transform_2(%arg0: i32, %arg1: i32, %arg2: i32) -> (i32, i32, i32, i32) {
    %c0_i32 = arith.constant 0 : i32
    %c0_i32_0 = arith.constant 0 : i32
    return %arg0, %arg1, %arg2, %c0_i32 : i32, i32, i32, i32
  }
  func.func @transform_3(%arg0: i32, %arg1: i32, %arg2: i32) -> (i32, i32) {
    %c0_i32 = arith.constant 0 : i32
    %c0_i32_0 = arith.constant 0 : i32
    %c0_i32_1 = arith.constant 0 : i32
    return %c0_i32, %c0_i32_0 : i32, i32
  }
  func.func @transform_4(%arg0: i32, %arg1: i32, %arg2: i32) -> (i32, i32) {
    %c0_i32 = arith.constant 0 : i32
    %c0_i32_0 = arith.constant 0 : i32
    %c0_i32_1 = arith.constant 0 : i32
    return %c0_i32, %c0_i32_0 : i32, i32
  }
  func.func @transform_5(%arg0: i32, %arg1: i32, %arg2: i32) -> (i32, i32) {
    %c0_i32 = arith.constant 0 : i32
    %c0_i32_0 = arith.constant 0 : i32
    %c0_i32_1 = arith.constant 0 : i32
    return %c0_i32, %c0_i32_0 : i32, i32
  }
  func.func @transform_6(%arg0: i32, %arg1: i32, %arg2: i32) -> (i32, i32) {
    %c0_i32 = arith.constant 0 : i32
    %c0_i32_0 = arith.constant 0 : i32
    %c0_i32_1 = arith.constant 0 : i32
    return %c0_i32, %c0_i32_0 : i32, i32
  }
  func.func @transform_7(%arg0: i32, %arg1: i32, %arg2: i32) -> (i32, i32) {
    %c0_i32 = arith.constant 0 : i32
    %c0_i32_0 = arith.constant 0 : i32
    %c0_i32_1 = arith.constant 0 : i32
    return %c0_i32, %c0_i32_0 : i32, i32
  }
  func.func @transform_8(%arg0: i32, %arg1: i32, %arg2: i32) -> (i32, i32) {
    %c0_i32 = arith.constant 0 : i32
    %c0_i32_0 = arith.constant 0 : i32
    %c0_i32_1 = arith.constant 0 : i32
    return %c0_i32, %c0_i32_0 : i32, i32
  }
  func.func @transform_9(%arg0: i32, %arg1: i32, %arg2: i32) -> (i32, i32) {
    %c0_i32 = arith.constant 0 : i32
    %c0_i32_0 = arith.constant 0 : i32
    %c0_i32_1 = arith.constant 0 : i32
    return %c0_i32, %c0_i32_0 : i32, i32
  }
  func.func @transform_10(%arg0: i32, %arg1: i32, %arg2: i32) -> (i32, i32) {
    %c0_i32 = arith.constant 0 : i32
    %c0_i32_0 = arith.constant 0 : i32
    %c0_i32_1 = arith.constant 0 : i32
    return %c0_i32, %c0_i32_0 : i32, i32
  }
  func.func @transform_11(%arg0: i32, %arg1: i32, %arg2: i32) -> (i32, i32) {
    %c0_i32 = arith.constant 0 : i32
    %c0_i32_0 = arith.constant 0 : i32
    %c0_i32_1 = arith.constant 0 : i32
    return %c0_i32, %c0_i32_0 : i32, i32
  }
  func.func @transform_12(%arg0: i32, %arg1: i32, %arg2: i32) -> (i32, i32) {
    %c0_i32 = arith.constant 0 : i32
    %c0_i32_0 = arith.constant 0 : i32
    %c0_i32_1 = arith.constant 0 : i32
    return %c0_i32, %c0_i32_0 : i32, i32
  }
  func.func @transform_13(%arg0: i32, %arg1: i32, %arg2: i32) -> (i32, i32) {
    %c0_i32 = arith.constant 0 : i32
    %c0_i32_0 = arith.constant 0 : i32
    %c0_i32_1 = arith.constant 0 : i32
    return %c0_i32, %c0_i32_0 : i32, i32
  }
  func.func @transform_14(%arg0: i32, %arg1: i32, %arg2: i32) -> (i32, i32) {
    %c0_i32 = arith.constant 0 : i32
    %c0_i32_0 = arith.constant 0 : i32
    %c0_i32_1 = arith.constant 0 : i32
    return %c0_i32, %c0_i32_0 : i32, i32
  }
  func.func @transform_15(%arg0: i32, %arg1: i32, %arg2: i32) -> (i32, i32) {
    %c0_i32 = arith.constant 0 : i32
    %c0_i32_0 = arith.constant 0 : i32
    %c0_i32_1 = arith.constant 0 : i32
    return %c0_i32, %c0_i32_0 : i32, i32
  }
  func.func @transform_16(%arg0: i32, %arg1: i32, %arg2: i32) -> (i32, i32) {
    %c0_i32 = arith.constant 0 : i32
    %c0_i32_0 = arith.constant 0 : i32
    %c0_i32_1 = arith.constant 0 : i32
    return %c0_i32, %c0_i32_0 : i32, i32
  }
  func.func @transform_17(%arg0: i32, %arg1: i32, %arg2: i32) -> (i32, i32, i32, i32) {
    %c0_i32 = arith.constant 0 : i32
    %c0_i32_0 = arith.constant 0 : i32
    return %arg0, %arg1, %arg2, %c0_i32 : i32, i32, i32, i32
  }
}

</mosaic_0001>

<llo_original>
// kernel: tpu_custom_call.1
$region0: #{tpu_custom_call.1}
  #allocation0 [shape = 'u32[]', space=smem, size = 0x4, offset = 0x4, fixed_abs, tag = 'smem constant byte address 0x4 - core index']
  #allocation1 [shape = 'u32[144,128]{1,0:T(1,128)}', space=vmem, size = 0x12000, scoped, tag = 'internal scratch']
  %s0 = inlined_call_operand.hbm [shape: f32[2,8,16], index: 0, kind: input, shape index: {}]
  %s1 = inlined_call_operand.vmem [shape: f32[2,8,8,32], index: 1, kind: input, shape index: {}]
  %s2 = inlined_call_operand.vmem [shape: f32[2,8,8,1], index: 2, kind: input, shape index: {}]
  %s3 = inlined_call_operand.hbm [shape: f32[16,32], index: 3, kind: input, shape index: {}]
  %s4 = inlined_call_operand.hbm [shape: f32[32,32], index: 4, kind: input, shape index: {}]
  %s5 = inlined_call_operand.hbm [shape: f32[16,32], index: 5, kind: input, shape index: {}]
  %s6 = inlined_call_operand.vmem [shape: f32[1,32], index: 6, kind: input, shape index: {}]
  %s7 = inlined_call_operand.vmem [shape: f32[32,32], index: 7, kind: input, shape index: {}]
  %s8 = inlined_call_operand.hbm [shape: f32[32,32], index: 8, kind: input, shape index: {}]
  %s9 = inlined_call_operand.hbm [shape: f32[32,32], index: 9, kind: input, shape index: {}]
  %s10 = inlined_call_operand.hbm [shape: f32[32,32], index: 10, kind: input, shape index: {}]
  %s11 = inlined_call_operand.hbm [shape: f32[32,32], index: 11, kind: input, shape index: {}]
  %s12 = inlined_call_operand.hbm [shape: f32[32,32], index: 12, kind: input, shape index: {}]
  %s13 = inlined_call_operand.vmem [shape: f32[1,32], index: 13, kind: input, shape index: {}]
  %s14 = inlined_call_operand.vmem [shape: f32[1,32], index: 14, kind: input, shape index: {}]
  %s15 = inlined_call_operand.vmem [shape: f32[1,32], index: 15, kind: input, shape index: {}]
  %s16 = inlined_call_operand.vmem [shape: f32[1,32], index: 16, kind: input, shape index: {}]
  %s17 = inlined_call_operand.hbm [shape: f32[2,8,8,32], index: 17, kind: output, shape index: {}]
  %s18 = sld [smem:[#allocation0]]
  $region137: #{tpu_custom_call.1} parent=0
    _
  %s20 = ssub.s32 1, %s18
  %s21 = scalar_select 0, %s20, %s18
  $region1: #{tpu_custom_call.1} parent=0
    #allocation2 [shape = 'u8[8192]{0}', space=vmem, size = 0x2000, scoped, tag = 'input window, operand 0']
    #allocation3 [shape = 's32[2]{0}', space=sflag, size = 0x8, scoped, tag = 'scoped memory for tpu_custom_call.1']
    #allocation4 [shape = 's32[2]{0}', space=sflag, size = 0x8, scoped, tag = 'scoped memory for tpu_custom_call.1']
    #allocation5 [shape = 'u8[8192]{0}', space=vmem, size = 0x2000, scoped, tag = 'input window, operand 3, single buffered']
    #allocation6 [shape = 's32[1]{0}', space=sflag, size = 0x4, scoped, tag = 'scoped memory for tpu_custom_call.1']
    #allocation7 [shape = 'u8[16384]{0}', space=vmem, size = 0x4000, scoped, tag = 'input window, operand 4, single buffered']
    #allocation8 [shape = 'u8[8192]{0}', space=vmem, size = 0x2000, scoped, tag = 'input window, operand 5, single buffered']
    #allocation9 [shape = 's32[1]{0}', space=sflag, size = 0x4, scoped, tag = 'scoped memory for tpu_custom_call.1']
    #allocation10 [shape = 'u8[16384]{0}', space=vmem, size = 0x4000, scoped, tag = 'input window, operand 8, single buffered']
    #allocation11 [shape = 'u8[16384]{0}', space=vmem, size = 0x4000, scoped, tag = 'input window, operand 9, single buffered']
    #allocation12 [shape = 's32[1]{0}', space=sflag, size = 0x4, scoped, tag = 'scoped memory for tpu_custom_call.1']
    #allocation13 [shape = 'u8[16384]{0}', space=vmem, size = 0x4000, scoped, tag = 'input window, operand 10, single buffered']
    #allocation14 [shape = 'u8[16384]{0}', space=vmem, size = 0x4000, scoped, tag = 'input window, operand 11, single buffered']
    #allocation15 [shape = 's32[1]{0}', space=sflag, size = 0x4, scoped, tag = 'scoped memory for tpu_custom_call.1']
    #allocation16 [shape = 'u8[16384]{0}', space=vmem, size = 0x4000, scoped, tag = 'input window, operand 12, single buffered']
    #allocation17 [shape = 'u8[8192]{0}', space=vmem, size = 0x2000, scoped, tag = 'output window, operand 0']
    %22 = vsyncpa [#allocation3], 0
    %s23 = scalar_lea.sflag [#allocation3], 1
    %24 = vsyncpa %s23, 0
    %25 = vsyncpa [#allocation6], 0
    %26 = vsyncpa [#allocation9], 0
    %27 = vsyncpa [#allocation12], 0
    %28 = vsyncpa [#allocation15], 0
    %29 = vsyncpa [#allocation4], 0
    %s30 = scalar_lea.sflag [#allocation4], 1
    %31 = vsyncpa %s30, 0
    loop: start=0, step=1, limit=18
    $region2: #{tpu_custom_call.1} parent=1 // loop_pre_header
      _
    $region3: #{tpu_custom_call.1} parent=1 // loop_header
      %s33 = sphi 0, %s37
      %p34 = scmp.ge.s32.totalorder %s33, 18
      %s40 = sphi 0, %s59
      %s41 = sphi 0, %s55
      %s42 = sphi 0, %s51
      %s43 = sphi 0, %s40
      %s44 = sphi 0, %s41
      %s45 = sphi 0, %s42
      %s46 = sphi 0, %s43
      %s47 = sphi 0, %s44
      %s48 = sphi 0, %s45
      %s62 = sphi 0, %s64
      %s65 = sphi 0, %s62
      %s66 = sphi 0, %s65
      %s82 = sphi 0, %s66
      %s92 = sphi 0, %s94
      %s95 = sphi 0, %s92
      %s96 = sphi 0, %s95
      %s112 = sphi 0, %s96
      %s122 = sphi 0, %s124
      %s125 = sphi 0, %s122
      %s126 = sphi 0, %s125
      %s142 = sphi 0, %s126
      %s146 = sphi 0, %s146
      %s148 = sphi 0, %s146
      %s149 = sphi 0, %s148
      %s163 = sphi 0, %s149
      %s167 = sphi 0, %s167
      %s169 = sphi 0, %s167
      %s170 = sphi 0, %s169
      %s184 = sphi 0, %s170
      %s188 = sphi 0, %s188
      %s190 = sphi 0, %s188
      %s191 = sphi 0, %s190
      %s205 = sphi 0, %s191
      %s209 = sphi 0, %s209
      %s211 = sphi 0, %s209
      %s212 = sphi 0, %s211
      %s226 = sphi 0, %s212
      %s230 = sphi 0, %s230
      %s232 = sphi 0, %s230
      %s233 = sphi 0, %s232
      %s247 = sphi 0, %s233
      %s251 = sphi 0, %s251
      %s253 = sphi 0, %s251
      %s254 = sphi 0, %s253
      %s268 = sphi 0, %s254
      %s272 = sphi 0, %s272
      %s274 = sphi 0, %s272
      %s275 = sphi 0, %s274
      %s289 = sphi 0, %s275
      %s293 = sphi 0, %s293
      %s295 = sphi 0, %s293
      %s296 = sphi 0, %s295
      %s310 = sphi 0, %s296
      %s314 = sphi 0, %s314
      %s316 = sphi 0, %s314
      %s317 = sphi 0, %s316
      %s331 = sphi 0, %s317
      %s335 = sphi 0, %s335
      %s337 = sphi 0, %s335
      %s338 = sphi 0, %s337
      %s352 = sphi 0, %s338
      %s356 = sphi 0, %s356
      %s358 = sphi 0, %s356
      %s359 = sphi 0, %s358
      %s373 = sphi 0, %s359
      %s377 = sphi 0, %s377
      %s379 = sphi 0, %s377
      %s380 = sphi 0, %s379
      %s394 = sphi 0, %s380
      %s398 = sphi 0, %s398
      %s400 = sphi 0, %s398
      %s401 = sphi 0, %s400
      %s415 = sphi 0, %s401
      %s419 = sphi 0, %s419
      %s421 = sphi 0, %s419
      %s422 = sphi 0, %s421
      %s436 = sphi 0, %s422
      %s446 = sphi 0, %s448
      %s449 = sphi 0, %s446
      %s450 = sphi 0, %s449
      %s466 = sphi 0, %s450
    $region4: #{tpu_custom_call.1} parent=1 // loop_header_branch
      %36 = sbr.rel (%p34) target = $region8
    $region5: #{tpu_custom_call.1} parent=1 // loop_body
      %s38 = ssub.s32 %s33, 1
      %s39 = ssub.s32 %s33, 2
      %s49 = sadd.s32 1, %s42
      %p50 = scmp.ge.s32.totalorder %s49, 1
      %s51 = scalar_select %p50, 0, %s49
      %s52 = sadd.s32 1, %s41
      %s53 = scalar_select %p50, %s52, %s41
      %p54 = scmp.ge.s32.totalorder %s53, 8
      %s55 = scalar_select %p54, 0, %s53
      %s56 = sadd.s32 1, %s40
      %s57 = scalar_select %p54, %s56, %s40
      %p58 = scmp.ge.s32.totalorder %s57, 2
      %s59 = scalar_select %p58, 0, %s57
      %s60 = ssub.s32 %s40, %s59
      %p61 = scmp.eq.s32.totalorder %s60, 0
      %s63 = sadd.s32 %s62, 1
      %s64 = scalar_select %p61, %s62, %s63
      %p67 = pneg %p61
      %p68 = scmp.eq.s32.totalorder %s33, 15
      %p69 = por %p67, %p68
      %p70 = scmp.ne.s32.totalorder %s62, %s65
      %p71 = scmp.eq.s32.totalorder %s33, 0
      %p72 = por %p70, %p71
      %p73 = scmp.ne.s32.totalorder %s62, %s65
      %p74 = scmp.eq.s32.totalorder %s38, 15
      %p75 = por %p73, %p74
      %p76 = scmp.ne.s32.totalorder %s65, %s66
      %p77 = scmp.eq.s32.totalorder %s38, 0
      %p78 = por %p76, %p77
      %p79 = scmp.ne.s32.totalorder %s65, %s66
      %p80 = scmp.eq.s32.totalorder %s39, 15
      %p81 = por %p79, %p80
      %p83 = scmp.ne.s32.totalorder %s66, %s82
      %p84 = scmp.eq.s32.totalorder %s39, 0
      %p85 = por %p83, %p84
      %s86 = ssub.s32 %s40, %s59
      %s87 = ssub.s32 %s41, %s55
      %s88 = sor.u32 %s86, %s87
      %s89 = ssub.s32 %s42, %s51
      %s90 = sor.u32 %s88, %s89
      %p91 = scmp.eq.s32.totalorder %s90, 0
      %s93 = sadd.s32 %s92, 1
      %s94 = scalar_select %p91, %s92, %s93
      %p97 = pneg %p91
      %p98 = scmp.eq.s32.totalorder %s33, 15
      %p99 = por %p97, %p98
      %p100 = scmp.ne.s32.totalorder %s92, %s95
      %p101 = scmp.eq.s32.totalorder %s33, 0
      %p102 = por %p100, %p101
      %p103 = scmp.ne.s32.totalorder %s92, %s95
      %p104 = scmp.eq.s32.totalorder %s38, 15
      %p105 = por %p103, %p104
      %p106 = scmp.ne.s32.totalorder %s95, %s96
      %p107 = scmp.eq.s32.totalorder %s38, 0
      %p108 = por %p106, %p107
      %p109 = scmp.ne.s32.totalorder %s95, %s96
      %p110 = scmp.eq.s32.totalorder %s39, 15
      %p111 = por %p109, %p110
      %p113 = scmp.ne.s32.totalorder %s96, %s112
      %p114 = scmp.eq.s32.totalorder %s39, 0
      %p115 = por %p113, %p114
      %s116 = ssub.s32 %s40, %s59
      %s117 = ssub.s32 %s41, %s55
      %s118 = sor.u32 %s116, %s117
      %s119 = ssub.s32 %s42, %s51
      %s120 = sor.u32 %s118, %s119
      %p121 = scmp.eq.s32.totalorder %s120, 0
      %s123 = sadd.s32 %s122, 1
      %s124 = scalar_select %p121, %s122, %s123
      %p127 = pneg %p121
      %p128 = scmp.eq.s32.totalorder %s33, 15
      %p129 = por %p127, %p128
      %p130 = scmp.ne.s32.totalorder %s122, %s125
      %p131 = scmp.eq.s32.totalorder %s33, 0
      %p132 = por %p130, %p131
      %p133 = scmp.ne.s32.totalorder %s122, %s125
      %p134 = scmp.eq.s32.totalorder %s38, 15
      %p135 = por %p133, %p134
      %p136 = scmp.ne.s32.totalorder %s125, %s126
      %p137 = scmp.eq.s32.totalorder %s38, 0
      %p138 = por %p136, %p137
      %p139 = scmp.ne.s32.totalorder %s125, %s126
      %p140 = scmp.eq.s32.totalorder %s39, 15
      %p141 = por %p139, %p140
      %p143 = scmp.ne.s32.totalorder %s126, %s142
      %p144 = scmp.eq.s32.totalorder %s39, 0
      %p145 = por %p143, %p144
      %s147 = sadd.s32 %s146, 1
      %p150 = scmp.eq.s32.totalorder %s33, 15
      %p151 = scmp.ne.s32.totalorder %s146, %s148
      %p152 = scmp.eq.s32.totalorder %s33, 0
      %p153 = por %p151, %p152
      %p154 = scmp.ne.s32.totalorder %s146, %s148
      %p155 = scmp.eq.s32.totalorder %s38, 15
      %p156 = por %p154, %p155
      %p157 = scmp.ne.s32.totalorder %s148, %s149
      %p158 = scmp.eq.s32.totalorder %s38, 0
      %p159 = por %p157, %p158
      %p160 = scmp.ne.s32.totalorder %s148, %s149
      %p161 = scmp.eq.s32.totalorder %s39, 15
      %p162 = por %p160, %p161
      %p164 = scmp.ne.s32.totalorder %s149, %s163
      %p165 = scmp.eq.s32.totalorder %s39, 0
      %p166 = por %p164, %p165
      %s168 = sadd.s32 %s167, 1
      %p171 = scmp.eq.s32.totalorder %s33, 15
      %p172 = scmp.ne.s32.totalorder %s167, %s169
      %p173 = scmp.eq.s32.totalorder %s33, 0
      %p174 = por %p172, %p173
      %p175 = scmp.ne.s32.totalorder %s167, %s169
      %p176 = scmp.eq.s32.totalorder %s38, 15
      %p177 = por %p175, %p176
      %p178 = scmp.ne.s32.totalorder %s169, %s170
      %p179 = scmp.eq.s32.totalorder %s38, 0
      %p180 = por %p178, %p179
      %p181 = scmp.ne.s32.totalorder %s169, %s170
      %p182 = scmp.eq.s32.totalorder %s39, 15
      %p183 = por %p181, %p182
      %p185 = scmp.ne.s32.totalorder %s170, %s184
      %p186 = scmp.eq.s32.totalorder %s39, 0
      %p187 = por %p185, %p186
      %s189 = sadd.s32 %s188, 1
      %p192 = scmp.eq.s32.totalorder %s33, 15
      %p193 = scmp.ne.s32.totalorder %s188, %s190
      %p194 = scmp.eq.s32.totalorder %s33, 0
      %p195 = por %p193, %p194
      %p196 = scmp.ne.s32.totalorder %s188, %s190
      %p197 = scmp.eq.s32.totalorder %s38, 15
      %p198 = por %p196, %p197
      %p199 = scmp.ne.s32.totalorder %s190, %s191
      %p200 = scmp.eq.s32.totalorder %s38, 0
      %p201 = por %p199, %p200
      %p202 = scmp.ne.s32.totalorder %s190, %s191
      %p203 = scmp.eq.s32.totalorder %s39, 15
      %p204 = por %p202, %p203
      %p206 = scmp.ne.s32.totalorder %s191, %s205
      %p207 = scmp.eq.s32.totalorder %s39, 0
      %p208 = por %p206, %p207
      %s210 = sadd.s32 %s209, 1
      %p213 = scmp.eq.s32.totalorder %s33, 15
      %p214 = scmp.ne.s32.totalorder %s209, %s211
      %p215 = scmp.eq.s32.totalorder %s33, 0
      %p216 = por %p214, %p215
      %p217 = scmp.ne.s32.totalorder %s209, %s211
      %p218 = scmp.eq.s32.totalorder %s38, 15
      %p219 = por %p217, %p218
      %p220 = scmp.ne.s32.totalorder %s211, %s212
      %p221 = scmp.eq.s32.totalorder %s38, 0
      %p222 = por %p220, %p221
      %p223 = scmp.ne.s32.totalorder %s211, %s212
      %p224 = scmp.eq.s32.totalorder %s39, 15
      %p225 = por %p223, %p224
      %p227 = scmp.ne.s32.totalorder %s212, %s226
      %p228 = scmp.eq.s32.totalorder %s39, 0
      %p229 = por %p227, %p228
      %s231 = sadd.s32 %s230, 1
      %p234 = scmp.eq.s32.totalorder %s33, 15
      %p235 = scmp.ne.s32.totalorder %s230, %s232
      %p236 = scmp.eq.s32.totalorder %s33, 0
      %p237 = por %p235, %p236
      %p238 = scmp.ne.s32.totalorder %s230, %s232
      %p239 = scmp.eq.s32.totalorder %s38, 15
      %p240 = por %p238, %p239
      %p241 = scmp.ne.s32.totalorder %s232, %s233
      %p242 = scmp.eq.s32.totalorder %s38, 0
      %p243 = por %p241, %p242
      %p244 = scmp.ne.s32.totalorder %s232, %s233
      %p245 = scmp.eq.s32.totalorder %s39, 15
      %p246 = por %p244, %p245
      %p248 = scmp.ne.s32.totalorder %s233, %s247
      %p249 = scmp.eq.s32.totalorder %s39, 0
      %p250 = por %p248, %p249
      %s252 = sadd.s32 %s251, 1
      %p255 = scmp.eq.s32.totalorder %s33, 15
      %p256 = scmp.ne.s32.totalorder %s251, %s253
      %p257 = scmp.eq.s32.totalorder %s33, 0
      %p258 = por %p256, %p257
      %p259 = scmp.ne.s32.totalorder %s251, %s253
      %p260 = scmp.eq.s32.totalorder %s38, 15
      %p261 = por %p259, %p260
      %p262 = scmp.ne.s32.totalorder %s253, %s254
      %p263 = scmp.eq.s32.totalorder %s38, 0
      %p264 = por %p262, %p263
      %p265 = scmp.ne.s32.totalorder %s253, %s254
      %p266 = scmp.eq.s32.totalorder %s39, 15
      %p267 = por %p265, %p266
      %p269 = scmp.ne.s32.totalorder %s254, %s268
      %p270 = scmp.eq.s32.totalorder %s39, 0
      %p271 = por %p269, %p270
      %s273 = sadd.s32 %s272, 1
      %p276 = scmp.eq.s32.totalorder %s33, 15
      %p277 = scmp.ne.s32.totalorder %s272, %s274
      %p278 = scmp.eq.s32.totalorder %s33, 0
      %p279 = por %p277, %p278
      %p280 = scmp.ne.s32.totalorder %s272, %s274
      %p281 = scmp.eq.s32.totalorder %s38, 15
      %p282 = por %p280, %p281
      %p283 = scmp.ne.s32.totalorder %s274, %s275
      %p284 = scmp.eq.s32.totalorder %s38, 0
      %p285 = por %p283, %p284
      %p286 = scmp.ne.s32.totalorder %s274, %s275
      %p287 = scmp.eq.s32.totalorder %s39, 15
      %p288 = por %p286, %p287
      %p290 = scmp.ne.s32.totalorder %s275, %s289
      %p291 = scmp.eq.s32.totalorder %s39, 0
      %p292 = por %p290, %p291
      %s294 = sadd.s32 %s293, 1
      %p297 = scmp.eq.s32.totalorder %s33, 15
      %p298 = scmp.ne.s32.totalorder %s293, %s295
      %p299 = scmp.eq.s32.totalorder %s33, 0
      %p300 = por %p298, %p299
      %p301 = scmp.ne.s32.totalorder %s293, %s295
      %p302 = scmp.eq.s32.totalorder %s38, 15
      %p303 = por %p301, %p302
      %p304 = scmp.ne.s32.totalorder %s295, %s296
      %p305 = scmp.eq.s32.totalorder %s38, 0
      %p306 = por %p304, %p305
      %p307 = scmp.ne.s32.totalorder %s295, %s296
      %p308 = scmp.eq.s32.totalorder %s39, 15
      %p309 = por %p307, %p308
      %p311 = scmp.ne.s32.totalorder %s296, %s310
      %p312 = scmp.eq.s32.totalorder %s39, 0
      %p313 = por %p311, %p312
      %s315 = sadd.s32 %s314, 1
      %p318 = scmp.eq.s32.totalorder %s33, 15
      %p319 = scmp.ne.s32.totalorder %s314, %s316
      %p320 = scmp.eq.s32.totalorder %s33, 0
      %p321 = por %p319, %p320
      %p322 = scmp.ne.s32.totalorder %s314, %s316
      %p323 = scmp.eq.s32.totalorder %s38, 15
      %p324 = por %p322, %p323
      %p325 = scmp.ne.s32.totalorder %s316, %s317
      %p326 = scmp.eq.s32.totalorder %s38, 0
      %p327 = por %p325, %p326
      %p328 = scmp.ne.s32.totalorder %s316, %s317
      %p329 = scmp.eq.s32.totalorder %s39, 15
      %p330 = por %p328, %p329
      %p332 = scmp.ne.s32.totalorder %s317, %s331
      %p333 = scmp.eq.s32.totalorder %s39, 0
      %p334 = por %p332, %p333
      %s336 = sadd.s32 %s335, 1
      %p339 = scmp.eq.s32.totalorder %s33, 15
      %p340 = scmp.ne.s32.totalorder %s335, %s337
      %p341 = scmp.eq.s32.totalorder %s33, 0
      %p342 = por %p340, %p341
      %p343 = scmp.ne.s32.totalorder %s335, %s337
      %p344 = scmp.eq.s32.totalorder %s38, 15
      %p345 = por %p343, %p344
      %p346 = scmp.ne.s32.totalorder %s337, %s338
      %p347 = scmp.eq.s32.totalorder %s38, 0
      %p348 = por %p346, %p347
      %p349 = scmp.ne.s32.totalorder %s337, %s338
      %p350 = scmp.eq.s32.totalorder %s39, 15
      %p351 = por %p349, %p350
      %p353 = scmp.ne.s32.totalorder %s338, %s352
      %p354 = scmp.eq.s32.totalorder %s39, 0
      %p355 = por %p353, %p354
      %s357 = sadd.s32 %s356, 1
      %p360 = scmp.eq.s32.totalorder %s33, 15
      %p361 = scmp.ne.s32.totalorder %s356, %s358
      %p362 = scmp.eq.s32.totalorder %s33, 0
      %p363 = por %p361, %p362
      %p364 = scmp.ne.s32.totalorder %s356, %s358
      %p365 = scmp.eq.s32.totalorder %s38, 15
      %p366 = por %p364, %p365
      %p367 = scmp.ne.s32.totalorder %s358, %s359
      %p368 = scmp.eq.s32.totalorder %s38, 0
      %p369 = por %p367, %p368
      %p370 = scmp.ne.s32.totalorder %s358, %s359
      %p371 = scmp.eq.s32.totalorder %s39, 15
      %p372 = por %p370, %p371
      %p374 = scmp.ne.s32.totalorder %s359, %s373
      %p375 = scmp.eq.s32.totalorder %s39, 0
      %p376 = por %p374, %p375
      %s378 = sadd.s32 %s377, 1
      %p381 = scmp.eq.s32.totalorder %s33, 15
      %p382 = scmp.ne.s32.totalorder %s377, %s379
      %p383 = scmp.eq.s32.totalorder %s33, 0
      %p384 = por %p382, %p383
      %p385 = scmp.ne.s32.totalorder %s377, %s379
      %p386 = scmp.eq.s32.totalorder %s38, 15
      %p387 = por %p385, %p386
      %p388 = scmp.ne.s32.totalorder %s379, %s380
      %p389 = scmp.eq.s32.totalorder %s38, 0
      %p390 = por %p388, %p389
      %p391 = scmp.ne.s32.totalorder %s379, %s380
      %p392 = scmp.eq.s32.totalorder %s39, 15
      %p393 = por %p391, %p392
      %p395 = scmp.ne.s32.totalorder %s380, %s394
      %p396 = scmp.eq.s32.totalorder %s39, 0
      %p397 = por %p395, %p396
      %s399 = sadd.s32 %s398, 1
      %p402 = scmp.eq.s32.totalorder %s33, 15
      %p403 = scmp.ne.s32.totalorder %s398, %s400
      %p404 = scmp.eq.s32.totalorder %s33, 0
      %p405 = por %p403, %p404
      %p406 = scmp.ne.s32.totalorder %s398, %s400
      %p407 = scmp.eq.s32.totalorder %s38, 15
      %p408 = por %p406, %p407
      %p409 = scmp.ne.s32.totalorder %s400, %s401
      %p410 = scmp.eq.s32.totalorder %s38, 0
      %p411 = por %p409, %p410
      %p412 = scmp.ne.s32.totalorder %s400, %s401
      %p413 = scmp.eq.s32.totalorder %s39, 15
      %p414 = por %p412, %p413
      %p416 = scmp.ne.s32.totalorder %s401, %s415
      %p417 = scmp.eq.s32.totalorder %s39, 0
      %p418 = por %p416, %p417
      %s420 = sadd.s32 %s419, 1
      %p423 = scmp.eq.s32.totalorder %s33, 15
      %p424 = scmp.ne.s32.totalorder %s419, %s421
      %p425 = scmp.eq.s32.totalorder %s33, 0
      %p426 = por %p424, %p425
      %p427 = scmp.ne.s32.totalorder %s419, %s421
      %p428 = scmp.eq.s32.totalorder %s38, 15
      %p429 = por %p427, %p428
      %p430 = scmp.ne.s32.totalorder %s421, %s422
      %p431 = scmp.eq.s32.totalorder %s38, 0
      %p432 = por %p430, %p431
      %p433 = scmp.ne.s32.totalorder %s421, %s422
      %p434 = scmp.eq.s32.totalorder %s39, 15
      %p435 = por %p433, %p434
      %p437 = scmp.ne.s32.totalorder %s422, %s436
      %p438 = scmp.eq.s32.totalorder %s39, 0
      %p439 = por %p437, %p438
      %s440 = ssub.s32 %s40, %s59
      %s441 = ssub.s32 %s41, %s55
      %s442 = sor.u32 %s440, %s441
      %s443 = ssub.s32 %s42, %s51
      %s444 = sor.u32 %s442, %s443
      %p445 = scmp.eq.s32.totalorder %s444, 0
      %s447 = sadd.s32 %s446, 1
      %s448 = scalar_select %p445, %s446, %s447
      %p451 = pneg %p445
      %p452 = scmp.eq.s32.totalorder %s33, 15
      %p453 = por %p451, %p452
      %p454 = scmp.ne.s32.totalorder %s446, %s449
      %p455 = scmp.eq.s32.totalorder %s33, 0
      %p456 = por %p454, %p455
      %p457 = scmp.ne.s32.totalorder %s446, %s449
      %p458 = scmp.eq.s32.totalorder %s38, 15
      %p459 = por %p457, %p458
      %p460 = scmp.ne.s32.totalorder %s449, %s450
      %p461 = scmp.eq.s32.totalorder %s38, 0
      %p462 = por %p460, %p461
      %p463 = scmp.ne.s32.totalorder %s449, %s450
      %p464 = scmp.eq.s32.totalorder %s39, 15
      %p465 = por %p463, %p464
      %p467 = scmp.ne.s32.totalorder %s450, %s466
      %p468 = scmp.eq.s32.totalorder %s39, 0
      %p469 = por %p467, %p468
      %p470 = scmp.le.s32.totalorder 1, %s33
      %p471 = scmp.lt.s32.totalorder %s33, 17
      %p472 = pnand %p470, %p471
      %p473 = pneg %p472
      // Predicated region
      $region9: #{tpu_custom_call.1} parent=5 // pred_check
        _
      $region10: #{tpu_custom_call.1} parent=5 // pred_check_branch
        %475 = sbr.rel (%p472) target = $region12
      $region11: #{tpu_custom_call.1} parent=5 // pred_region
        %s476 = ssub.s32 %s33, 1
        // Predicated region
        $region13: #{tpu_custom_call.1} parent=11 // pred_check
          %p477 = pneg %p159
        $region14: #{tpu_custom_call.1} parent=11 // pred_check_branch
          %479 = sbr.rel (%p477) target = $region16
        $region15: #{tpu_custom_call.1} parent=11 // pred_region
          %s481 = ssub.s32 256, 256
          %482 = vsyncadd [#allocation6], %s481
          %s483 = sshll.u32 [#allocation5], 4
          %s484 = int_to_ptr.vmem [resolvable:$true] %s483
          %489 = dma.hbm_to_vmem [thread:$0]  %s3, 256, %s484, [#allocation6], 128, 128, 8
        $region16: #{tpu_custom_call.1} parent=11 // pred_fallthru
          _
        // Predicated region
        $region17: #{tpu_custom_call.1} parent=11 // pred_check
          %p490 = pneg %p180
        $region18: #{tpu_custom_call.1} parent=11 // pred_check_branch
          %492 = sbr.rel (%p490) target = $region20
        $region19: #{tpu_custom_call.1} parent=11 // pred_region
          %s494 = ssub.s32 512, 512
          %495 = vsyncadd [#allocation6], %s494
          %s496 = sshll.u32 [#allocation7], 4
          %s497 = int_to_ptr.vmem [resolvable:$true] %s496
          %502 = dma.hbm_to_vmem [thread:$0]  %s4, 512, %s497, [#allocation6], 128, 128, 8
        $region20: #{tpu_custom_call.1} parent=11 // pred_fallthru
          _
        // Predicated region
        $region21: #{tpu_custom_call.1} parent=11 // pred_check
          %p503 = pneg %p201
        $region22: #{tpu_custom_call.1} parent=11 // pred_check_branch
          %505 = sbr.rel (%p503) target = $region24
        $region23: #{tpu_custom_call.1} parent=11 // pred_region
          %s507 = ssub.s32 256, 256
          %508 = vsyncadd [#allocation9], %s507
          %s509 = sshll.u32 [#allocation8], 4
          %s510 = int_to_ptr.vmem [resolvable:$true] %s509
          %515 = dma.hbm_to_vmem [thread:$0]  %s5, 256, %s510, [#allocation9], 128, 128, 8
        $region24: #{tpu_custom_call.1} parent=11 // pred_fallthru
          _
        // Predicated region
        $region25: #{tpu_custom_call.1} parent=11 // pred_check
          %p516 = pneg %p222
        $region26: #{tpu_custom_call.1} parent=11 // pred_check_branch
          %518 = sbr.rel (%p516) target = $region28
        $region27: #{tpu_custom_call.1} parent=11 // pred_region
          _
        $region28: #{tpu_custom_call.1} parent=11 // pred_fallthru
          _
        // Predicated region
        $region29: #{tpu_custom_call.1} parent=11 // pred_check
          %p519 = pneg %p243
        $region30: #{tpu_custom_call.1} parent=11 // pred_check_branch
          %521 = sbr.rel (%p519) target = $region32
        $region31: #{tpu_custom_call.1} parent=11 // pred_region
          _
        $region32: #{tpu_custom_call.1} parent=11 // pred_fallthru
          _
        // Predicated region
        $region33: #{tpu_custom_call.1} parent=11 // pred_check
          %p522 = pneg %p264
        $region34: #{tpu_custom_call.1} parent=11 // pred_check_branch
          %524 = sbr.rel (%p522) target = $region36
        $region35: #{tpu_custom_call.1} parent=11 // pred_region
          %s526 = ssub.s32 512, 512
          %527 = vsyncadd [#allocation9], %s526
          %s528 = sshll.u32 [#allocation10], 4
          %s529 = int_to_ptr.vmem [resolvable:$true] %s528
          %534 = dma.hbm_to_vmem [thread:$0]  %s8, 512, %s529, [#allocation9], 128, 128, 8
        $region36: #{tpu_custom_call.1} parent=11 // pred_fallthru
          _
        // Predicated region
        $region37: #{tpu_custom_call.1} parent=11 // pred_check
          %p535 = pneg %p285
        $region38: #{tpu_custom_call.1} parent=11 // pred_check_branch
          %537 = sbr.rel (%p535) target = $region40
        $region39: #{tpu_custom_call.1} parent=11 // pred_region
          %s539 = ssub.s32 512, 512
          %540 = vsyncadd [#allocation12], %s539
          %s541 = sshll.u32 [#allocation11], 4
          %s542 = int_to_ptr.vmem [resolvable:$true] %s541
          %547 = dma.hbm_to_vmem [thread:$0]  %s9, 512, %s542, [#allocation12], 128, 128, 8
        $region40: #{tpu_custom_call.1} parent=11 // pred_fallthru
          _
        // Predicated region
        $region41: #{tpu_custom_call.1} parent=11 // pred_check
          %p548 = pneg %p306
        $region42: #{tpu_custom_call.1} parent=11 // pred_check_branch
          %550 = sbr.rel (%p548) target = $region44
        $region43: #{tpu_custom_call.1} parent=11 // pred_region
          %s552 = ssub.s32 512, 512
          %553 = vsyncadd [#allocation12], %s552
          %s554 = sshll.u32 [#allocation13], 4
          %s555 = int_to_ptr.vmem [resolvable:$true] %s554
          %560 = dma.hbm_to_vmem [thread:$0]  %s10, 512, %s555, [#allocation12], 128, 128, 8
        $region44: #{tpu_custom_call.1} parent=11 // pred_fallthru
          _
        // Predicated region
        $region45: #{tpu_custom_call.1} parent=11 // pred_check
          %p561 = pneg %p327
        $region46: #{tpu_custom_call.1} parent=11 // pred_check_branch
          %563 = sbr.rel (%p561) target = $region48
        $region47: #{tpu_custom_call.1} parent=11 // pred_region
          %s565 = ssub.s32 512, 512
          %566 = vsyncadd [#allocation15], %s565
          %s567 = sshll.u32 [#allocation14], 4
          %s568 = int_to_ptr.vmem [resolvable:$true] %s567
          %573 = dma.hbm_to_vmem [thread:$0]  %s11, 512, %s568, [#allocation15], 128, 128, 8
        $region48: #{tpu_custom_call.1} parent=11 // pred_fallthru
          _
        // Predicated region
        $region49: #{tpu_custom_call.1} parent=11 // pred_check
          %p574 = pneg %p348
        $region50: #{tpu_custom_call.1} parent=11 // pred_check_branch
          %576 = sbr.rel (%p574) target = $region52
        $region51: #{tpu_custom_call.1} parent=11 // pred_region
          %s578 = ssub.s32 512, 512
          %579 = vsyncadd [#allocation15], %s578
          %s580 = sshll.u32 [#allocation16], 4
          %s581 = int_to_ptr.vmem [resolvable:$true] %s580
          %586 = dma.hbm_to_vmem [thread:$0]  %s12, 512, %s581, [#allocation15], 128, 128, 8
        $region52: #{tpu_custom_call.1} parent=11 // pred_fallthru
          _
        // Predicated region
        $region53: #{tpu_custom_call.1} parent=11 // pred_check
          %p587 = pneg %p369
        $region54: #{tpu_custom_call.1} parent=11 // pred_check_branch
          %589 = sbr.rel (%p587) target = $region56
        $region55: #{tpu_custom_call.1} parent=11 // pred_region
          _
        $region56: #{tpu_custom_call.1} parent=11 // pred_fallthru
          _
        // Predicated region
        $region57: #{tpu_custom_call.1} parent=11 // pred_check
          %p590 = pneg %p390
        $region58: #{tpu_custom_call.1} parent=11 // pred_check_branch
          %592 = sbr.rel (%p590) target = $region60
        $region59: #{tpu_custom_call.1} parent=11 // pred_region
          _
        $region60: #{tpu_custom_call.1} parent=11 // pred_fallthru
          _
        // Predicated region
        $region61: #{tpu_custom_call.1} parent=11 // pred_check
          %p593 = pneg %p411
        $region62: #{tpu_custom_call.1} parent=11 // pred_check_branch
          %595 = sbr.rel (%p593) target = $region64
        $region63: #{tpu_custom_call.1} parent=11 // pred_region
          _
        $region64: #{tpu_custom_call.1} parent=11 // pred_fallthru
          _
        // Predicated region
        $region65: #{tpu_custom_call.1} parent=11 // pred_check
          %p596 = pneg %p432
        $region66: #{tpu_custom_call.1} parent=11 // pred_check_branch
          %598 = sbr.rel (%p596) target = $region68
        $region67: #{tpu_custom_call.1} parent=11 // pred_region
          _
        $region68: #{tpu_custom_call.1} parent=11 // pred_fallthru
          _
      $region12: #{tpu_custom_call.1} parent=5 // pred_fallthru
        _
      %p599 = scmp.lt.s32.totalorder %s33, 16
      // Predicated region
      $region69: #{tpu_custom_call.1} parent=5 // pred_check
        %p600 = pneg %p599
      $region70: #{tpu_custom_call.1} parent=5 // pred_check_branch
        %602 = sbr.rel (%p600) target = $region72
      $region71: #{tpu_custom_call.1} parent=5 // pred_region
        // Predicated region
        $region73: #{tpu_custom_call.1} parent=71 // pred_check
          %p603 = pneg %p72
        $region74: #{tpu_custom_call.1} parent=71 // pred_check_branch
          %605 = sbr.rel (%p603) target = $region76
        $region75: #{tpu_custom_call.1} parent=71 // pred_region
          %s606 = sand.u32 %s62, 1
          %s607 = scalar_lea.sflag [#allocation3], %s606
          %s608 = sand.u32 %s62, 1
          %s609 = smul.addr %s608, 8
          %s610 = scalar_lea.vmem [#allocation2], %s609
          %s612 = ssub.s32 128, 128
          %613 = vsyncadd %s607, %s612
          %s614 = smul.addr %s40, 128
          %s615 = scalar_lea.hbm %s0, %s614
          %s617 = sshll.u32 %s610, 4
          %s618 = int_to_ptr.vmem [resolvable:$true] %s617
          %620 = dma.hbm_to_vmem [thread:$0]  %s615, 128, %s618, %s607
        $region76: #{tpu_custom_call.1} parent=71 // pred_fallthru
          _
        // Predicated region
        $region77: #{tpu_custom_call.1} parent=71 // pred_check
          %p621 = pneg %p102
        $region78: #{tpu_custom_call.1} parent=71 // pred_check_branch
          %623 = sbr.rel (%p621) target = $region80
        $region79: #{tpu_custom_call.1} parent=71 // pred_region
          %p624 = scmp.lt.s32.totalorder %s40, 1
          %s625 = scalar_select %p624, %s40, 1
          %p626 = scmp.lt.s32.totalorder %s41, 7
          %s627 = scalar_select %p626, %s41, 7
          %p628 = scmp.lt.s32.totalorder %s42, 0
          %s629 = scalar_select %p628, %s42, 0
          %s630 = sadd.s32 %s629, %s627
          %s631 = smul.addr %s625, 8
          %s632 = sadd.s32 %s630, %s631
          %s633 = smul.addr %s632, 8
          %s634 = scalar_lea.vmem %s1, %s633
        $region80: #{tpu_custom_call.1} parent=71 // pred_fallthru
          _
        // Predicated region
        $region81: #{tpu_custom_call.1} parent=71 // pred_check
          %p635 = pneg %p132
        $region82: #{tpu_custom_call.1} parent=71 // pred_check_branch
          %637 = sbr.rel (%p635) target = $region84
        $region83: #{tpu_custom_call.1} parent=71 // pred_region
          %p638 = scmp.lt.s32.totalorder %s40, 1
          %s639 = scalar_select %p638, %s40, 1
          %p640 = scmp.lt.s32.totalorder %s41, 7
          %s641 = scalar_select %p640, %s41, 7
          %p642 = scmp.lt.s32.totalorder %s42, 0
          %s643 = scalar_select %p642, %s42, 0
          %s644 = sadd.s32 %s643, %s641
          %s645 = smul.addr %s639, 8
          %s646 = sadd.s32 %s644, %s645
          %s647 = smul.addr %s646, 8
          %s648 = scalar_lea.vmem %s2, %s647
        $region84: #{tpu_custom_call.1} parent=71 // pred_fallthru
          _
      $region72: #{tpu_custom_call.1} parent=5 // pred_fallthru
        _
      %p649 = scmp.le.s32.totalorder 1, %s33
      %p650 = scmp.lt.s32.totalorder %s33, 17
      %p651 = pnand %p649, %p650
      %p652 = pneg %p651
      // Predicated region
      $region85: #{tpu_custom_call.1} parent=5 // pred_check
        _
      $region86: #{tpu_custom_call.1} parent=5 // pred_check_branch
        %654 = sbr.rel (%p651) target = $region88
      $region87: #{tpu_custom_call.1} parent=5 // pred_region
        %s655 = ssub.s32 %s33, 1
        %s656 = sand.u32 %s65, 1
        %s657 = scalar_lea.sflag [#allocation3], %s656
        %s658 = sand.u32 %s65, 1
        %s659 = smul.addr %s658, 8
        %s660 = scalar_lea.vmem [#allocation2], %s659
        // Predicated region
        $region89: #{tpu_custom_call.1} parent=87 // pred_check
          %p661 = pneg %p78
        $region90: #{tpu_custom_call.1} parent=87 // pred_check_branch
          %663 = sbr.rel (%p661) target = $region92
        $region91: #{tpu_custom_call.1} parent=87 // pred_region
          %664 = dma.done %s657, 128
        $region92: #{tpu_custom_call.1} parent=87 // pred_fallthru
          _
        // Predicated region
        $region93: #{tpu_custom_call.1} parent=87 // pred_check
          %p665 = pneg %p159
        $region94: #{tpu_custom_call.1} parent=87 // pred_check_branch
          %667 = sbr.rel (%p665) target = $region96
        $region95: #{tpu_custom_call.1} parent=87 // pred_region
          %668 = dma.done [#allocation6], 256
        $region96: #{tpu_custom_call.1} parent=87 // pred_fallthru
          _
        // Predicated region
        $region97: #{tpu_custom_call.1} parent=87 // pred_check
          %p669 = pneg %p180
        $region98: #{tpu_custom_call.1} parent=87 // pred_check_branch
          %671 = sbr.rel (%p669) target = $region100
        $region99: #{tpu_custom_call.1} parent=87 // pred_region
          %672 = dma.done [#allocation6], 512
        $region100: #{tpu_custom_call.1} parent=87 // pred_fallthru
          _
        // Predicated region
        $region101: #{tpu_custom_call.1} parent=87 // pred_check
          %p673 = pneg %p201
        $region102: #{tpu_custom_call.1} parent=87 // pred_check_branch
          %675 = sbr.rel (%p673) target = $region104
        $region103: #{tpu_custom_call.1} parent=87 // pred_region
          %676 = dma.done [#allocation9], 256
        $region104: #{tpu_custom_call.1} parent=87 // pred_fallthru
          _
        // Predicated region
        $region105: #{tpu_custom_call.1} parent=87 // pred_check
          %p677 = pneg %p264
        $region106: #{tpu_custom_call.1} parent=87 // pred_check_branch
          %679 = sbr.rel (%p677) target = $region108
        $region107: #{tpu_custom_call.1} parent=87 // pred_region
          %680 = dma.done [#allocation9], 512
        $region108: #{tpu_custom_call.1} parent=87 // pred_fallthru
          _
        // Predicated region
        $region109: #{tpu_custom_call.1} parent=87 // pred_check
          %p681 = pneg %p285
        $region110: #{tpu_custom_call.1} parent=87 // pred_check_branch
          %683 = sbr.rel (%p681) target = $region112
        $region111: #{tpu_custom_call.1} parent=87 // pred_region
          %684 = dma.done [#allocation12], 512
        $region112: #{tpu_custom_call.1} parent=87 // pred_fallthru
          _
        // Predicated region
        $region113: #{tpu_custom_call.1} parent=87 // pred_check
          %p685 = pneg %p306
        $region114: #{tpu_custom_call.1} parent=87 // pred_check_branch
          %687 = sbr.rel (%p685) target = $region116
        $region115: #{tpu_custom_call.1} parent=87 // pred_region
          %688 = dma.done [#allocation12], 512
        $region116: #{tpu_custom_call.1} parent=87 // pred_fallthru
          _
        // Predicated region
        $region117: #{tpu_custom_call.1} parent=87 // pred_check
          %p689 = pneg %p327
        $region118: #{tpu_custom_call.1} parent=87 // pred_check_branch
          %691 = sbr.rel (%p689) target = $region120
        $region119: #{tpu_custom_call.1} parent=87 // pred_region
          %692 = dma.done [#allocation15], 512
        $region120: #{tpu_custom_call.1} parent=87 // pred_fallthru
          _
        // Predicated region
        $region121: #{tpu_custom_call.1} parent=87 // pred_check
          %p693 = pneg %p348
        $region122: #{tpu_custom_call.1} parent=87 // pred_check_branch
          %695 = sbr.rel (%p693) target = $region124
        $region123: #{tpu_custom_call.1} parent=87 // pred_region
          %696 = dma.done [#allocation15], 512
        $region124: #{tpu_custom_call.1} parent=87 // pred_fallthru
          _
        %s697 = sand.u32 %s65, 1
        %s698 = scalar_lea.sflag [#allocation3], %s697
        %s699 = sand.u32 %s65, 1
        %s700 = smul.addr %s699, 8
        %s701 = scalar_lea.vmem [#allocation2], %s700
        %p702 = pneg %p78
        %p703 = pneg %p75
        %p704 = scmp.lt.s32.totalorder %s43, 1
        %s705 = scalar_select %p704, %s43, 1
        %p706 = scmp.lt.s32.totalorder %s44, 7
        %s707 = scalar_select %p706, %s44, 7
        %p708 = scmp.lt.s32.totalorder %s45, 0
        %s709 = scalar_select %p708, %s45, 0
        %s710 = sadd.s32 %s709, %s707
        %s711 = smul.addr %s705, 8
        %s712 = sadd.s32 %s710, %s711
        %s713 = smul.addr %s712, 8
        %s714 = scalar_lea.vmem %s1, %s713
        %p715 = pneg %p108
        %p716 = pneg %p105
        %p717 = scmp.lt.s32.totalorder %s43, 1
        %s718 = scalar_select %p717, %s43, 1
        %p719 = scmp.lt.s32.totalorder %s44, 7
        %s720 = scalar_select %p719, %s44, 7
        %p721 = scmp.lt.s32.totalorder %s45, 0
        %s722 = scalar_select %p721, %s45, 0
        %s723 = sadd.s32 %s722, %s720
        %s724 = smul.addr %s718, 8
        %s725 = sadd.s32 %s723, %s724
        %s726 = smul.addr %s725, 8
        %s727 = scalar_lea.vmem %s2, %s726
        %p728 = pneg %p138
        %p729 = pneg %p135
        %p730 = pneg %p159
        %p731 = pneg %p156
        %p732 = pneg %p180
        %p733 = pneg %p177
        %p734 = pneg %p201
        %p735 = pneg %p198
        %p736 = pneg %p222
        %p737 = pneg %p219
        %p738 = pneg %p243
        %p739 = pneg %p240
        %p740 = pneg %p264
        %p741 = pneg %p261
        %p742 = pneg %p285
        %p743 = pneg %p282
        %p744 = pneg %p306
        %p745 = pneg %p303
        %p746 = pneg %p327
        %p747 = pneg %p324
        %p748 = pneg %p348
        %p749 = pneg %p345
        %p750 = pneg %p369
        %p751 = pneg %p366
        %p752 = pneg %p390
        %p753 = pneg %p387
        %p754 = pneg %p411
        %p755 = pneg %p408
        %p756 = pneg %p432
        %p757 = pneg %p429
        %p758 = pneg %p462
        %p759 = pneg %p459
        %s760 = sand.u32 %s449, 1
        %s761 = scalar_lea.sflag [#allocation4], %s760
        %s762 = sand.u32 %s449, 1
        %s763 = smul.addr %s762, 8
        %s764 = scalar_lea.vmem [#allocation17], %s763
        %p765 = scmp.lt.s32.totalorder %s43, 1
        %s766 = scalar_select %p765, %s43, 1
        %p767 = scmp.lt.s32.totalorder %s44, 7
        %s768 = scalar_select %p767, %s44, 7
        %p769 = scmp.lt.s32.totalorder %s45, 0
        %s770 = scalar_select %p769, %s45, 0
        %s771 = sadd.s32 %s770, %s768
        %s772 = smul.addr %s766, 8
        %s773 = sadd.s32 %s771, %s772
        %s774 = smul.addr %s773, 8
        %s775 = scalar_lea.vmem %s1, %s774
        %p776 = scmp.lt.s32.totalorder %s43, 1
        %s777 = scalar_select %p776, %s43, 1
        %p778 = scmp.lt.s32.totalorder %s44, 7
        %s779 = scalar_select %p778, %s44, 7
        %p780 = scmp.lt.s32.totalorder %s45, 0
        %s781 = scalar_select %p780, %s45, 0
        %s782 = sadd.s32 %s781, %s779
        %s783 = smul.addr %s777, 8
        %s784 = sadd.s32 %s782, %s783
        %s785 = smul.addr %s784, 8
        %s786 = scalar_lea.vmem %s2, %s785
        %s787 = scalar_lea.vmem %s660, %s44 [#allocation2]
        %v788 = vld [vmem:[%s787] sm:$0x1]
        %s789 = smul.u32 %s45, 8
        %s790 = scalar_lea.vmem %s660, %s789 [#allocation2]
        %v791 = vld [vmem:[%s790] sm:$0xff]
        %v792 = vld [vmem:[%s775] sm:$0xff]
        %v793 = vld [vmem:[%s786] sm:$0xff]
        %v794 = vld [vmem:[#allocation8] sm:$0xff]
        %v795 = vld [vmem:[#allocation8 + $0x8] sm:$0xff]
        %vm796 = vcmask 130048
        %v798 = vsel %vm796, %v788, 0
        %800 = vmatprep.subr.mxu0 0.0
        %801 = vmatpush1.msra.mxu0 %v794
        %802 = vmatprep.subr.mxu0 0.0
        %803 = vmatpush1.msra.mxu0 %v795
        %804 = vmatprep.subr.mxu0 0.0
        %805 = vmatpush1.msra.mxu0 0.0
        %806 = vmatprep.subr.mxu0 0.0
        %807 = vmatpush1.msra.mxu0 0.0
        %808 = vmatprep.subr.mxu0 0.0
        %809 = vmatpush1.msra.mxu0 0.0
        %810 = vmatprep.subr.mxu0 0.0
        %811 = vmatpush1.msra.mxu0 0.0
        %812 = vmatprep.subr.mxu0 0.0
        %813 = vmatpush1.msra.mxu0 0.0
        %814 = vmatprep.subr.mxu0 0.0
        %815 = vmatpush1.msra.mxu0 0.0
        %816 = vmatprep.subr.mxu0 0.0
        %817 = vmatpush1.msra.mxu0 0.0
        %818 = vmatprep.subr.mxu0 0.0
        %819 = vmatpush1.msra.mxu0 0.0
        %820 = vmatprep.subr.mxu0 0.0
        %821 = vmatpush1.msra.mxu0 0.0
        %822 = vmatprep.subr.mxu0 0.0
        %823 = vmatpush1.msra.mxu0 0.0
        %824 = vmatprep.subr.mxu0 0.0
        %825 = vmatpush1.msra.mxu0 0.0
        %826 = vmatprep.subr.mxu0 0.0
        %827 = vmatpush1.msra.mxu0 0.0
        %828 = vmatprep.subr.mxu0 0.0
        %829 = vmatpush1.msra.mxu0 0.0
        %830 = vmatprep.subr.mxu0 0.0
        %831 = vmatpush1.msra.mxu0 0.0
        %832 = vmatprep.subr.mxu0 0.0
        %833 = vmatpush1.msra.mxu0 0.0
        %834 = vmatprep.subr.mxu0 0.0
        %835 = vmatpush1.msra.mxu0 0.0
        %836 = vmatprep.subr.mxu0 0.0
        %837 = vmatpush1.msra.mxu0 0.0
        %838 = vmatprep.subr.mxu0 0.0
        %839 = vmatpush1.msra.mxu0 0.0
        %840 = vmatprep.subr.mxu0 0.0
        %841 = vmatpush1.msra.mxu0 0.0
        %842 = vmatprep.subr.mxu0 0.0
        %843 = vmatpush1.msra.mxu0 0.0
        %844 = vmatprep.subr.mxu0 0.0
        %845 = vmatpush1.msra.mxu0 0.0
        %846 = vmatprep.subr.mxu0 0.0
        %847 = vmatpush1.msra.mxu0 0.0
        %848 = vmatprep.subr.mxu0 0.0
        %849 = vmatpush1.msra.mxu0 0.0
        %850 = vmatprep.subr.mxu0 0.0
        %851 = vmatpush1.msra.mxu0 0.0
        %852 = vmatprep.subr.mxu0 0.0
        %853 = vmatpush1.msra.mxu0 0.0
        %854 = vmatprep.subr.mxu0 0.0
        %855 = vmatpush1.msra.mxu0 0.0
        %856 = vmatprep.subr.mxu0 0.0
        %857 = vmatpush1.msra.mxu0 0.0
        %858 = vmatprep.subr.mxu0 0.0
        %859 = vmatpush1.msra.mxu0 0.0
        %860 = vmatprep.subr.mxu0 0.0
        %861 = vmatpush1.msra.mxu0 0.0
        %862 = vmatprep.subr.mxu0 0.0
        %863 = vmatpush1.msra.mxu0 0.0
        %864 = vmatprep.mubr.f32.mxu0 0.0
        %865 = vmatmul.mubr.f32.gmra.mrb[0].mxu0 %v798
        %v866 = vpop.f32.mrb[0].mxu0
        %v867 = vadd.f32 0.0, %v866
        %v868 = vpop.f32.mrb[0].mxu0
        %869 = vdwg.mxu0
        %v870 = vld [vmem:[#allocation5] sm:$0xff]
        %v871 = vld [vmem:[#allocation5 + $0x8] sm:$0xff]
        %v873 = vsel %vm796, %v791, 0
        %875 = vmatprep.subr.mxu0 0.0
        %876 = vmatpush1.msra.mxu0 %v870
        %877 = vmatprep.subr.mxu0 0.0
        %878 = vmatpush1.msra.mxu0 %v871
        %879 = vmatprep.subr.mxu0 0.0
        %880 = vmatpush1.msra.mxu0 0.0
        %881 = vmatprep.subr.mxu0 0.0
        %882 = vmatpush1.msra.mxu0 0.0
        %883 = vmatprep.subr.mxu0 0.0
        %884 = vmatpush1.msra.mxu0 0.0
        %885 = vmatprep.subr.mxu0 0.0
        %886 = vmatpush1.msra.mxu0 0.0
        %887 = vmatprep.subr.mxu0 0.0
        %888 = vmatpush1.msra.mxu0 0.0
        %889 = vmatprep.subr.mxu0 0.0
        %890 = vmatpush1.msra.mxu0 0.0
        %891 = vmatprep.subr.mxu0 0.0
        %892 = vmatpush1.msra.mxu0 0.0
        %893 = vmatprep.subr.mxu0 0.0
        %894 = vmatpush1.msra.mxu0 0.0
        %895 = vmatprep.subr.mxu0 0.0
        %896 = vmatpush1.msra.mxu0 0.0
        %897 = vmatprep.subr.mxu0 0.0
        %898 = vmatpush1.msra.mxu0 0.0
        %899 = vmatprep.subr.mxu0 0.0
        %900 = vmatpush1.msra.mxu0 0.0
        %901 = vmatprep.subr.mxu0 0.0
        %902 = vmatpush1.msra.mxu0 0.0
        %903 = vmatprep.subr.mxu0 0.0
        %904 = vmatpush1.msra.mxu0 0.0
        %905 = vmatprep.subr.mxu0 0.0
        %906 = vmatpush1.msra.mxu0 0.0
        %907 = vmatprep.subr.mxu0 0.0
        %908 = vmatpush1.msra.mxu0 0.0
        %909 = vmatprep.subr.mxu0 0.0
        %910 = vmatpush1.msra.mxu0 0.0
        %911 = vmatprep.subr.mxu0 0.0
        %912 = vmatpush1.msra.mxu0 0.0
        %913 = vmatprep.subr.mxu0 0.0
        %914 = vmatpush1.msra.mxu0 0.0
        %915 = vmatprep.subr.mxu0 0.0
        %916 = vmatpush1.msra.mxu0 0.0
        %917 = vmatprep.subr.mxu0 0.0
        %918 = vmatpush1.msra.mxu0 0.0
        %919 = vmatprep.subr.mxu0 0.0
        %920 = vmatpush1.msra.mxu0 0.0
        %921 = vmatprep.subr.mxu0 0.0
        %922 = vmatpush1.msra.mxu0 0.0
        %923 = vmatprep.subr.mxu0 0.0
        %924 = vmatpush1.msra.mxu0 0.0
        %925 = vmatprep.subr.mxu0 0.0
        %926 = vmatpush1.msra.mxu0 0.0
        %927 = vmatprep.subr.mxu0 0.0
        %928 = vmatpush1.msra.mxu0 0.0
        %929 = vmatprep.subr.mxu0 0.0
        %930 = vmatpush1.msra.mxu0 0.0
        %931 = vmatprep.subr.mxu0 0.0
        %932 = vmatpush1.msra.mxu0 0.0
        %933 = vmatprep.subr.mxu0 0.0
        %934 = vmatpush1.msra.mxu0 0.0
        %935 = vmatprep.subr.mxu0 0.0
        %936 = vmatpush1.msra.mxu0 0.0
        %937 = vmatprep.subr.mxu0 0.0
        %938 = vmatpush1.msra.mxu0 0.0
        %939 = vmatprep.mubr.f32.mxu0 0.0
        %940 = vmatmul.mubr.f32.gmra.mrb[0].mxu0 %v873
        %v941 = vpop.f32.mrb[0].mxu0
        %v942 = vadd.f32 0.0, %v941
        %v943 = vpop.f32.mrb[0].mxu0
        %944 = vdwg.mxu0
        %v945 = vld [vmem:[#allocation7] sm:$0xff]
        %v946 = vld [vmem:[#allocation7 + $0x8] sm:$0xff]
        %v947 = vld [vmem:[#allocation7 + $0x10] sm:$0xff]
        %v948 = vld [vmem:[#allocation7 + $0x18] sm:$0xff]
        %vm949 = vcmask 261120
        %v951 = vsel %vm949, %v792, 0
        %953 = vmatprep.subr.mxu0 0.0
        %954 = vmatpush1.msra.mxu0 %v945
        %955 = vmatprep.subr.mxu0 0.0
        %956 = vmatpush1.msra.mxu0 %v946
        %957 = vmatprep.subr.mxu0 0.0
        %958 = vmatpush1.msra.mxu0 %v947
        %959 = vmatprep.subr.mxu0 0.0
        %960 = vmatpush1.msra.mxu0 %v948
        %961 = vmatprep.subr.mxu0 0.0
        %962 = vmatpush1.msra.mxu0 0.0
        %963 = vmatprep.subr.mxu0 0.0
        %964 = vmatpush1.msra.mxu0 0.0
        %965 = vmatprep.subr.mxu0 0.0
        %966 = vmatpush1.msra.mxu0 0.0
        %967 = vmatprep.subr.mxu0 0.0
        %968 = vmatpush1.msra.mxu0 0.0
        %969 = vmatprep.subr.mxu0 0.0
        %970 = vmatpush1.msra.mxu0 0.0
        %971 = vmatprep.subr.mxu0 0.0
        %972 = vmatpush1.msra.mxu0 0.0
        %973 = vmatprep.subr.mxu0 0.0
        %974 = vmatpush1.msra.mxu0 0.0
        %975 = vmatprep.subr.mxu0 0.0
        %976 = vmatpush1.msra.mxu0 0.0
        %977 = vmatprep.subr.mxu0 0.0
        %978 = vmatpush1.msra.mxu0 0.0
        %979 = vmatprep.subr.mxu0 0.0
        %980 = vmatpush1.msra.mxu0 0.0
        %981 = vmatprep.subr.mxu0 0.0
        %982 = vmatpush1.msra.mxu0 0.0
        %983 = vmatprep.subr.mxu0 0.0
        %984 = vmatpush1.msra.mxu0 0.0
        %985 = vmatprep.subr.mxu0 0.0
        %986 = vmatpush1.msra.mxu0 0.0
        %987 = vmatprep.subr.mxu0 0.0
        %988 = vmatpush1.msra.mxu0 0.0
        %989 = vmatprep.subr.mxu0 0.0
        %990 = vmatpush1.msra.mxu0 0.0
        %991 = vmatprep.subr.mxu0 0.0
        %992 = vmatpush1.msra.mxu0 0.0
        %993 = vmatprep.subr.mxu0 0.0
        %994 = vmatpush1.msra.mxu0 0.0
        %995 = vmatprep.subr.mxu0 0.0
        %996 = vmatpush1.msra.mxu0 0.0
        %997 = vmatprep.subr.mxu0 0.0
        %998 = vmatpush1.msra.mxu0 0.0
        %999 = vmatprep.subr.mxu0 0.0
        %1000 = vmatpush1.msra.mxu0 0.0
        %1001 = vmatprep.subr.mxu0 0.0
        %1002 = vmatpush1.msra.mxu0 0.0
        %1003 = vmatprep.subr.mxu0 0.0
        %1004 = vmatpush1.msra.mxu0 0.0
        %1005 = vmatprep.subr.mxu0 0.0
        %1006 = vmatpush1.msra.mxu0 0.0
        %1007 = vmatprep.subr.mxu0 0.0
        %1008 = vmatpush1.msra.mxu0 0.0
        %1009 = vmatprep.subr.mxu0 0.0
        %1010 = vmatpush1.msra.mxu0 0.0
        %1011 = vmatprep.subr.mxu0 0.0
        %1012 = vmatpush1.msra.mxu0 0.0
        %1013 = vmatprep.subr.mxu0 0.0
        %1014 = vmatpush1.msra.mxu0 0.0
        %1015 = vmatprep.subr.mxu0 0.0
        %1016 = vmatpush1.msra.mxu0 0.0
        %1017 = vmatprep.mubr.f32.mxu0 0.0
        %1018 = vmatmul.mubr.f32.gmra.mrb[0].mxu0 %v951
        %v1019 = vpop.f32.mrb[0].mxu0
        %v1020 = vadd.f32 0.0, %v1019
        %v1021 = vpop.f32.mrb[0].mxu0
        %1022 = vdwg.mxu0
        %v1023 = vlaneseq
        %v1024 = vshrl.u32 %v1023, 7
        %v1025 = vsub.s32 0, %v1024
        %v1026 = vrot.slane %v867, %v1025
        %v1027 = vadd.f32 %v1026, %v942
        %v1028 = vadd.f32 %v1027, %v1020
        %v1029 = vld [vmem:[%s6] sm:$0x1]
        %v1031 = vlaneseq
        %v1032 = vshrl.u32 %v1031, 7
        %v1033 = vsub.s32 0, %v1032
        %v1034 = vrot.slane %v1029, %v1033
        %v1036 = vadd.f32 %v1028, %v1034
        %1038 = vset.pattern.permute.xlu0 0
        %1039 = vperm.xlu0 %1038, %v793
        %v1040 = vpop.permute.xlu0 %1039
        %v1042 = vmul.f32 %v1036, %v1040
        %v1043 = vld [vmem:[%s7] sm:$0xff]
        %v1044 = vld [vmem:[%s7 + $0x8] sm:$0xff]
        %v1045 = vld [vmem:[%s7 + $0x10] sm:$0xff]
        %v1046 = vld [vmem:[%s7 + $0x18] sm:$0xff]
        %v1047 = vld [vmem:[#allocation13] sm:$0xff]
        %v1048 = vld [vmem:[#allocation13 + $0x8] sm:$0xff]
        %v1049 = vld [vmem:[#allocation13 + $0x10] sm:$0xff]
        %v1050 = vld [vmem:[#allocation13 + $0x18] sm:$0xff]
        %1051 = vmatprep.subr.mxu0 0.0
        %1052 = vmatpush1.msra.mxu0 %v1047
        %1053 = vmatprep.subr.mxu0 0.0
        %1054 = vmatpush1.msra.mxu0 %v1048
        %1055 = vmatprep.subr.mxu0 0.0
        %1056 = vmatpush1.msra.mxu0 %v1049
        %1057 = vmatprep.subr.mxu0 0.0
        %1058 = vmatpush1.msra.mxu0 %v1050
        %1059 = vmatprep.subr.mxu0 0.0
        %1060 = vmatpush1.msra.mxu0 0.0
        %1061 = vmatprep.subr.mxu0 0.0
        %1062 = vmatpush1.msra.mxu0 0.0
        %1063 = vmatprep.subr.mxu0 0.0
        %1064 = vmatpush1.msra.mxu0 0.0
        %1065 = vmatprep.subr.mxu0 0.0
        %1066 = vmatpush1.msra.mxu0 0.0
        %1067 = vmatprep.subr.mxu0 0.0
        %1068 = vmatpush1.msra.mxu0 0.0
        %1069 = vmatprep.subr.mxu0 0.0
        %1070 = vmatpush1.msra.mxu0 0.0
        %1071 = vmatprep.subr.mxu0 0.0
        %1072 = vmatpush1.msra.mxu0 0.0
        %1073 = vmatprep.subr.mxu0 0.0
        %1074 = vmatpush1.msra.mxu0 0.0
        %1075 = vmatprep.subr.mxu0 0.0
        %1076 = vmatpush1.msra.mxu0 0.0
        %1077 = vmatprep.subr.mxu0 0.0
        %1078 = vmatpush1.msra.mxu0 0.0
        %1079 = vmatprep.subr.mxu0 0.0
        %1080 = vmatpush1.msra.mxu0 0.0
        %1081 = vmatprep.subr.mxu0 0.0
        %1082 = vmatpush1.msra.mxu0 0.0
        %1083 = vmatprep.subr.mxu0 0.0
        %1084 = vmatpush1.msra.mxu0 0.0
        %1085 = vmatprep.subr.mxu0 0.0
        %1086 = vmatpush1.msra.mxu0 0.0
        %1087 = vmatprep.subr.mxu0 0.0
        %1088 = vmatpush1.msra.mxu0 0.0
        %1089 = vmatprep.subr.mxu0 0.0
        %1090 = vmatpush1.msra.mxu0 0.0
        %1091 = vmatprep.subr.mxu0 0.0
        %1092 = vmatpush1.msra.mxu0 0.0
        %1093 = vmatprep.subr.mxu0 0.0
        %1094 = vmatpush1.msra.mxu0 0.0
        %1095 = vmatprep.subr.mxu0 0.0
        %1096 = vmatpush1.msra.mxu0 0.0
        %1097 = vmatprep.subr.mxu0 0.0
        %1098 = vmatpush1.msra.mxu0 0.0
        %1099 = vmatprep.subr.mxu0 0.0
        %1100 = vmatpush1.msra.mxu0 0.0
        %1101 = vmatprep.subr.mxu0 0.0
        %1102 = vmatpush1.msra.mxu0 0.0
        %1103 = vmatprep.subr.mxu0 0.0
        %1104 = vmatpush1.msra.mxu0 0.0
        %1105 = vmatprep.subr.mxu0 0.0
        %1106 = vmatpush1.msra.mxu0 0.0
        %1107 = vmatprep.subr.mxu0 0.0
        %1108 = vmatpush1.msra.mxu0 0.0
        %1109 = vmatprep.subr.mxu0 0.0
        %1110 = vmatpush1.msra.mxu0 0.0
        %1111 = vmatprep.subr.mxu0 0.0
        %1112 = vmatpush1.msra.mxu0 0.0
        %1113 = vmatprep.subr.mxu0 0.0
        %1114 = vmatpush1.msra.mxu0 0.0
        %1115 = vmatprep.mubr.f32.mxu0 0.0
        %1116 = vmatmul.mubr.f32.gmra.mrb[0].mxu0 %v951
        %v1117 = vpop.f32.mrb[0].mxu0
        %v1118 = vadd.f32 0.0, %v1117
        %v1119 = vpop.f32.mrb[0].mxu0
        %1120 = vdwg.mxu0
        %v1122 = vsel %vm949, %v1042, 0
        %1124 = vmatprep.subr.mxu0 0.0
        %1125 = vmatpush1.msra.mxu0 %v1043
        %1126 = vmatprep.subr.mxu0 0.0
        %1127 = vmatpush1.msra.mxu0 %v1044
        %1128 = vmatprep.subr.mxu0 0.0
        %1129 = vmatpush1.msra.mxu0 %v1045
        %1130 = vmatprep.subr.mxu0 0.0
        %1131 = vmatpush1.msra.mxu0 %v1046
        %1132 = vmatprep.subr.mxu0 0.0
        %1133 = vmatpush1.msra.mxu0 0.0
        %1134 = vmatprep.subr.mxu0 0.0
        %1135 = vmatpush1.msra.mxu0 0.0
        %1136 = vmatprep.subr.mxu0 0.0
        %1137 = vmatpush1.msra.mxu0 0.0
        %1138 = vmatprep.subr.mxu0 0.0
        %1139 = vmatpush1.msra.mxu0 0.0
        %1140 = vmatprep.subr.mxu0 0.0
        %1141 = vmatpush1.msra.mxu0 0.0
        %1142 = vmatprep.subr.mxu0 0.0
        %1143 = vmatpush1.msra.mxu0 0.0
        %1144 = vmatprep.subr.mxu0 0.0
        %1145 = vmatpush1.msra.mxu0 0.0
        %1146 = vmatprep.subr.mxu0 0.0
        %1147 = vmatpush1.msra.mxu0 0.0
        %1148 = vmatprep.subr.mxu0 0.0
        %1149 = vmatpush1.msra.mxu0 0.0
        %1150 = vmatprep.subr.mxu0 0.0
        %1151 = vmatpush1.msra.mxu0 0.0
        %1152 = vmatprep.subr.mxu0 0.0
        %1153 = vmatpush1.msra.mxu0 0.0
        %1154 = vmatprep.subr.mxu0 0.0
        %1155 = vmatpush1.msra.mxu0 0.0
        %1156 = vmatprep.subr.mxu0 0.0
        %1157 = vmatpush1.msra.mxu0 0.0
        %1158 = vmatprep.subr.mxu0 0.0
        %1159 = vmatpush1.msra.mxu0 0.0
        %1160 = vmatprep.subr.mxu0 0.0
        %1161 = vmatpush1.msra.mxu0 0.0
        %1162 = vmatprep.subr.mxu0 0.0
        %1163 = vmatpush1.msra.mxu0 0.0
        %1164 = vmatprep.subr.mxu0 0.0
        %1165 = vmatpush1.msra.mxu0 0.0
        %1166 = vmatprep.subr.mxu0 0.0
        %1167 = vmatpush1.msra.mxu0 0.0
        %1168 = vmatprep.subr.mxu0 0.0
        %1169 = vmatpush1.msra.mxu0 0.0
        %1170 = vmatprep.subr.mxu0 0.0
        %1171 = vmatpush1.msra.mxu0 0.0
        %1172 = vmatprep.subr.mxu0 0.0
        %1173 = vmatpush1.msra.mxu0 0.0
        %1174 = vmatprep.subr.mxu0 0.0
        %1175 = vmatpush1.msra.mxu0 0.0
        %1176 = vmatprep.subr.mxu0 0.0
        %1177 = vmatpush1.msra.mxu0 0.0
        %1178 = vmatprep.subr.mxu0 0.0
        %1179 = vmatpush1.msra.mxu0 0.0
        %1180 = vmatprep.subr.mxu0 0.0
        %1181 = vmatpush1.msra.mxu0 0.0
        %1182 = vmatprep.subr.mxu0 0.0
        %1183 = vmatpush1.msra.mxu0 0.0
        %1184 = vmatprep.subr.mxu0 0.0
        %1185 = vmatpush1.msra.mxu0 0.0
        %1186 = vmatprep.subr.mxu0 0.0
        %1187 = vmatpush1.msra.mxu0 0.0
        %1188 = vmatprep.mubr.f32.mxu0 0.0
        %1189 = vmatmul.mubr.f32.gmra.mrb[0].mxu0 %v1122
        %v1190 = vpop.f32.mrb[0].mxu0
        %v1191 = vadd.f32 %v1118, %v1190
        %v1192 = vpop.f32.mrb[0].mxu0
        %1193 = vdwg.mxu0
        %v1194 = vld [vmem:[%s13] sm:$0x1]
        %v1196 = vlaneseq
        %v1197 = vshrl.u32 %v1196, 7
        %v1198 = vsub.s32 0, %v1197
        %v1199 = vrot.slane %v1194, %v1198
        %v1201 = vadd.f32 %v1191, %v1199
        %v1202 = vld [vmem:[#allocation10] sm:$0xff]
        %v1203 = vld [vmem:[#allocation10 + $0x8] sm:$0xff]
        %v1204 = vld [vmem:[#allocation10 + $0x10] sm:$0xff]
        %v1205 = vld [vmem:[#allocation10 + $0x18] sm:$0xff]
        %v1206 = vld [vmem:[#allocation14] sm:$0xff]
        %v1207 = vld [vmem:[#allocation14 + $0x8] sm:$0xff]
        %v1208 = vld [vmem:[#allocation14 + $0x10] sm:$0xff]
        %v1209 = vld [vmem:[#allocation14 + $0x18] sm:$0xff]
        %1210 = vmatprep.subr.mxu0 0.0
        %1211 = vmatpush1.msra.mxu0 %v1206
        %1212 = vmatprep.subr.mxu0 0.0
        %1213 = vmatpush1.msra.mxu0 %v1207
        %1214 = vmatprep.subr.mxu0 0.0
        %1215 = vmatpush1.msra.mxu0 %v1208
        %1216 = vmatprep.subr.mxu0 0.0
        %1217 = vmatpush1.msra.mxu0 %v1209
        %1218 = vmatprep.subr.mxu0 0.0
        %1219 = vmatpush1.msra.mxu0 0.0
        %1220 = vmatprep.subr.mxu0 0.0
        %1221 = vmatpush1.msra.mxu0 0.0
        %1222 = vmatprep.subr.mxu0 0.0
        %1223 = vmatpush1.msra.mxu0 0.0
        %1224 = vmatprep.subr.mxu0 0.0
        %1225 = vmatpush1.msra.mxu0 0.0
        %1226 = vmatprep.subr.mxu0 0.0
        %1227 = vmatpush1.msra.mxu0 0.0
        %1228 = vmatprep.subr.mxu0 0.0
        %1229 = vmatpush1.msra.mxu0 0.0
        %1230 = vmatprep.subr.mxu0 0.0
        %1231 = vmatpush1.msra.mxu0 0.0
        %1232 = vmatprep.subr.mxu0 0.0
        %1233 = vmatpush1.msra.mxu0 0.0
        %1234 = vmatprep.subr.mxu0 0.0
        %1235 = vmatpush1.msra.mxu0 0.0
        %1236 = vmatprep.subr.mxu0 0.0
        %1237 = vmatpush1.msra.mxu0 0.0
        %1238 = vmatprep.subr.mxu0 0.0
        %1239 = vmatpush1.msra.mxu0 0.0
        %1240 = vmatprep.subr.mxu0 0.0
        %1241 = vmatpush1.msra.mxu0 0.0
        %1242 = vmatprep.subr.mxu0 0.0
        %1243 = vmatpush1.msra.mxu0 0.0
        %1244 = vmatprep.subr.mxu0 0.0
        %1245 = vmatpush1.msra.mxu0 0.0
        %1246 = vmatprep.subr.mxu0 0.0
        %1247 = vmatpush1.msra.mxu0 0.0
        %1248 = vmatprep.subr.mxu0 0.0
        %1249 = vmatpush1.msra.mxu0 0.0
        %1250 = vmatprep.subr.mxu0 0.0
        %1251 = vmatpush1.msra.mxu0 0.0
        %1252 = vmatprep.subr.mxu0 0.0
        %1253 = vmatpush1.msra.mxu0 0.0
        %1254 = vmatprep.subr.mxu0 0.0
        %1255 = vmatpush1.msra.mxu0 0.0
        %1256 = vmatprep.subr.mxu0 0.0
        %1257 = vmatpush1.msra.mxu0 0.0
        %1258 = vmatprep.subr.mxu0 0.0
        %1259 = vmatpush1.msra.mxu0 0.0
        %1260 = vmatprep.subr.mxu0 0.0
        %1261 = vmatpush1.msra.mxu0 0.0
        %1262 = vmatprep.subr.mxu0 0.0
        %1263 = vmatpush1.msra.mxu0 0.0
        %1264 = vmatprep.subr.mxu0 0.0
        %1265 = vmatpush1.msra.mxu0 0.0
        %1266 = vmatprep.subr.mxu0 0.0
        %1267 = vmatpush1.msra.mxu0 0.0
        %1268 = vmatprep.subr.mxu0 0.0
        %1269 = vmatpush1.msra.mxu0 0.0
        %1270 = vmatprep.subr.mxu0 0.0
        %1271 = vmatpush1.msra.mxu0 0.0
        %1272 = vmatprep.subr.mxu0 0.0
        %1273 = vmatpush1.msra.mxu0 0.0
        %1274 = vmatprep.mubr.f32.mxu0 0.0
        %1275 = vmatmul.mubr.f32.gmra.mrb[0].mxu0 %v951
        %v1276 = vpop.f32.mrb[0].mxu0
        %v1277 = vadd.f32 0.0, %v1276
        %v1278 = vpop.f32.mrb[0].mxu0
        %1279 = vdwg.mxu0
        %1280 = vmatprep.subr.mxu0 0.0
        %1281 = vmatpush1.msra.mxu0 %v1202
        %1282 = vmatprep.subr.mxu0 0.0
        %1283 = vmatpush1.msra.mxu0 %v1203
        %1284 = vmatprep.subr.mxu0 0.0
        %1285 = vmatpush1.msra.mxu0 %v1204
        %1286 = vmatprep.subr.mxu0 0.0
        %1287 = vmatpush1.msra.mxu0 %v1205
        %1288 = vmatprep.subr.mxu0 0.0
        %1289 = vmatpush1.msra.mxu0 0.0
        %1290 = vmatprep.subr.mxu0 0.0
        %1291 = vmatpush1.msra.mxu0 0.0
        %1292 = vmatprep.subr.mxu0 0.0
        %1293 = vmatpush1.msra.mxu0 0.0
        %1294 = vmatprep.subr.mxu0 0.0
        %1295 = vmatpush1.msra.mxu0 0.0
        %1296 = vmatprep.subr.mxu0 0.0
        %1297 = vmatpush1.msra.mxu0 0.0
        %1298 = vmatprep.subr.mxu0 0.0
        %1299 = vmatpush1.msra.mxu0 0.0
        %1300 = vmatprep.subr.mxu0 0.0
        %1301 = vmatpush1.msra.mxu0 0.0
        %1302 = vmatprep.subr.mxu0 0.0
        %1303 = vmatpush1.msra.mxu0 0.0
        %1304 = vmatprep.subr.mxu0 0.0
        %1305 = vmatpush1.msra.mxu0 0.0
        %1306 = vmatprep.subr.mxu0 0.0
        %1307 = vmatpush1.msra.mxu0 0.0
        %1308 = vmatprep.subr.mxu0 0.0
        %1309 = vmatpush1.msra.mxu0 0.0
        %1310 = vmatprep.subr.mxu0 0.0
        %1311 = vmatpush1.msra.mxu0 0.0
        %1312 = vmatprep.subr.mxu0 0.0
        %1313 = vmatpush1.msra.mxu0 0.0
        %1314 = vmatprep.subr.mxu0 0.0
        %1315 = vmatpush1.msra.mxu0 0.0
        %1316 = vmatprep.subr.mxu0 0.0
        %1317 = vmatpush1.msra.mxu0 0.0
        %1318 = vmatprep.subr.mxu0 0.0
        %1319 = vmatpush1.msra.mxu0 0.0
        %1320 = vmatprep.subr.mxu0 0.0
        %1321 = vmatpush1.msra.mxu0 0.0
        %1322 = vmatprep.subr.mxu0 0.0
        %1323 = vmatpush1.msra.mxu0 0.0
        %1324 = vmatprep.subr.mxu0 0.0
        %1325 = vmatpush1.msra.mxu0 0.0
        %1326 = vmatprep.subr.mxu0 0.0
        %1327 = vmatpush1.msra.mxu0 0.0
        %1328 = vmatprep.subr.mxu0 0.0
        %1329 = vmatpush1.msra.mxu0 0.0
        %1330 = vmatprep.subr.mxu0 0.0
        %1331 = vmatpush1.msra.mxu0 0.0
        %1332 = vmatprep.subr.mxu0 0.0
        %1333 = vmatpush1.msra.mxu0 0.0
        %1334 = vmatprep.subr.mxu0 0.0
        %1335 = vmatpush1.msra.mxu0 0.0
        %1336 = vmatprep.subr.mxu0 0.0
        %1337 = vmatpush1.msra.mxu0 0.0
        %1338 = vmatprep.subr.mxu0 0.0
        %1339 = vmatpush1.msra.mxu0 0.0
        %1340 = vmatprep.subr.mxu0 0.0
        %1341 = vmatpush1.msra.mxu0 0.0
        %1342 = vmatprep.subr.mxu0 0.0
        %1343 = vmatpush1.msra.mxu0 0.0
        %1344 = vmatprep.mubr.f32.mxu0 0.0
        %1345 = vmatmul.mubr.f32.gmra.mrb[0].mxu0 %v1122
        %v1346 = vpop.f32.mrb[0].mxu0
        %v1347 = vadd.f32 %v1277, %v1346
        %v1348 = vpop.f32.mrb[0].mxu0
        %1349 = vdwg.mxu0
        %v1350 = vld [vmem:[%s14] sm:$0x1]
        %v1352 = vlaneseq
        %v1353 = vshrl.u32 %v1352, 7
        %v1354 = vsub.s32 0, %v1353
        %v1355 = vrot.slane %v1350, %v1354
        %v1357 = vadd.f32 %v1347, %v1355
        %v1358 = vxor.u32 %v1201, 2147483648
        %v1359 = vmul.f32 %v1358, 1.442695
        %v1360 = vpow.pop %v1359
        %v1361 = vadd.f32 %v1360, 1.0
        %v1362 = vrcp.pop %v1361
        %v1363 = vmul.f32 1.0, %v1362
        %v1364 = vxor.u32 %v1357, 2147483648
        %v1365 = vmul.f32 %v1364, 1.442695
        %v1366 = vpow.pop %v1365
        %v1367 = vadd.f32 %v1366, 1.0
        %v1368 = vrcp.pop %v1367
        %v1369 = vmul.f32 1.0, %v1368
        %v1370 = vld [vmem:[#allocation11] sm:$0xff]
        %v1371 = vld [vmem:[#allocation11 + $0x8] sm:$0xff]
        %v1372 = vld [vmem:[#allocation11 + $0x10] sm:$0xff]
        %v1373 = vld [vmem:[#allocation11 + $0x18] sm:$0xff]
        %v1374 = vld [vmem:[%s15] sm:$0x1]
        %v1376 = vlaneseq
        %v1377 = vshrl.u32 %v1376, 7
        %v1378 = vsub.s32 0, %v1377
        %v1379 = vrot.slane %v1374, %v1378
        %1381 = vmatprep.subr.mxu0 0.0
        %1382 = vmatpush1.msra.mxu0 %v1370
        %1383 = vmatprep.subr.mxu0 0.0
        %1384 = vmatpush1.msra.mxu0 %v1371
        %1385 = vmatprep.subr.mxu0 0.0
        %1386 = vmatpush1.msra.mxu0 %v1372
        %1387 = vmatprep.subr.mxu0 0.0
        %1388 = vmatpush1.msra.mxu0 %v1373
        %1389 = vmatprep.subr.mxu0 0.0
        %1390 = vmatpush1.msra.mxu0 0.0
        %1391 = vmatprep.subr.mxu0 0.0
        %1392 = vmatpush1.msra.mxu0 0.0
        %1393 = vmatprep.subr.mxu0 0.0
        %1394 = vmatpush1.msra.mxu0 0.0
        %1395 = vmatprep.subr.mxu0 0.0
        %1396 = vmatpush1.msra.mxu0 0.0
        %1397 = vmatprep.subr.mxu0 0.0
        %1398 = vmatpush1.msra.mxu0 0.0
        %1399 = vmatprep.subr.mxu0 0.0
        %1400 = vmatpush1.msra.mxu0 0.0
        %1401 = vmatprep.subr.mxu0 0.0
        %1402 = vmatpush1.msra.mxu0 0.0
        %1403 = vmatprep.subr.mxu0 0.0
        %1404 = vmatpush1.msra.mxu0 0.0
        %1405 = vmatprep.subr.mxu0 0.0
        %1406 = vmatpush1.msra.mxu0 0.0
        %1407 = vmatprep.subr.mxu0 0.0
        %1408 = vmatpush1.msra.mxu0 0.0
        %1409 = vmatprep.subr.mxu0 0.0
        %1410 = vmatpush1.msra.mxu0 0.0
        %1411 = vmatprep.subr.mxu0 0.0
        %1412 = vmatpush1.msra.mxu0 0.0
        %1413 = vmatprep.subr.mxu0 0.0
        %1414 = vmatpush1.msra.mxu0 0.0
        %1415 = vmatprep.subr.mxu0 0.0
        %1416 = vmatpush1.msra.mxu0 0.0
        %1417 = vmatprep.subr.mxu0 0.0
        %1418 = vmatpush1.msra.mxu0 0.0
        %1419 = vmatprep.subr.mxu0 0.0
        %1420 = vmatpush1.msra.mxu0 0.0
        %1421 = vmatprep.subr.mxu0 0.0
        %1422 = vmatpush1.msra.mxu0 0.0
        %1423 = vmatprep.subr.mxu0 0.0
        %1424 = vmatpush1.msra.mxu0 0.0
        %1425 = vmatprep.subr.mxu0 0.0
        %1426 = vmatpush1.msra.mxu0 0.0
        %1427 = vmatprep.subr.mxu0 0.0
        %1428 = vmatpush1.msra.mxu0 0.0
        %1429 = vmatprep.subr.mxu0 0.0
        %1430 = vmatpush1.msra.mxu0 0.0
        %1431 = vmatprep.subr.mxu0 0.0
        %1432 = vmatpush1.msra.mxu0 0.0
        %1433 = vmatprep.subr.mxu0 0.0
        %1434 = vmatpush1.msra.mxu0 0.0
        %1435 = vmatprep.subr.mxu0 0.0
        %1436 = vmatpush1.msra.mxu0 0.0
        %1437 = vmatprep.subr.mxu0 0.0
        %1438 = vmatpush1.msra.mxu0 0.0
        %1439 = vmatprep.subr.mxu0 0.0
        %1440 = vmatpush1.msra.mxu0 0.0
        %1441 = vmatprep.subr.mxu0 0.0
        %1442 = vmatpush1.msra.mxu0 0.0
        %1443 = vmatprep.subr.mxu0 0.0
        %1444 = vmatpush1.msra.mxu0 0.0
        %1445 = vmatprep.mubr.f32.mxu0 0.0
        %1446 = vmatmul.mubr.f32.gmra.mrb[0].mxu0 %v1122
        %v1447 = vpop.f32.mrb[0].mxu0
        %v1448 = vadd.f32 %v1379, %v1447
        %v1449 = vpop.f32.mrb[0].mxu0
        %1450 = vdwg.mxu0
        %v1451 = vld [vmem:[#allocation16] sm:$0xff]
        %v1452 = vld [vmem:[#allocation16 + $0x8] sm:$0xff]
        %v1453 = vld [vmem:[#allocation16 + $0x10] sm:$0xff]
        %v1454 = vld [vmem:[#allocation16 + $0x18] sm:$0xff]
        %v1455 = vld [vmem:[%s16] sm:$0x1]
        %v1457 = vlaneseq
        %v1458 = vshrl.u32 %v1457, 7
        %v1459 = vsub.s32 0, %v1458
        %v1460 = vrot.slane %v1455, %v1459
        %1462 = vmatprep.subr.mxu0 0.0
        %1463 = vmatpush1.msra.mxu0 %v1451
        %1464 = vmatprep.subr.mxu0 0.0
        %1465 = vmatpush1.msra.mxu0 %v1452
        %1466 = vmatprep.subr.mxu0 0.0
        %1467 = vmatpush1.msra.mxu0 %v1453
        %1468 = vmatprep.subr.mxu0 0.0
        %1469 = vmatpush1.msra.mxu0 %v1454
        %1470 = vmatprep.subr.mxu0 0.0
        %1471 = vmatpush1.msra.mxu0 0.0
        %1472 = vmatprep.subr.mxu0 0.0
        %1473 = vmatpush1.msra.mxu0 0.0
        %1474 = vmatprep.subr.mxu0 0.0
        %1475 = vmatpush1.msra.mxu0 0.0
        %1476 = vmatprep.subr.mxu0 0.0
        %1477 = vmatpush1.msra.mxu0 0.0
        %1478 = vmatprep.subr.mxu0 0.0
        %1479 = vmatpush1.msra.mxu0 0.0
        %1480 = vmatprep.subr.mxu0 0.0
        %1481 = vmatpush1.msra.mxu0 0.0
        %1482 = vmatprep.subr.mxu0 0.0
        %1483 = vmatpush1.msra.mxu0 0.0
        %1484 = vmatprep.subr.mxu0 0.0
        %1485 = vmatpush1.msra.mxu0 0.0
        %1486 = vmatprep.subr.mxu0 0.0
        %1487 = vmatpush1.msra.mxu0 0.0
        %1488 = vmatprep.subr.mxu0 0.0
        %1489 = vmatpush1.msra.mxu0 0.0
        %1490 = vmatprep.subr.mxu0 0.0
        %1491 = vmatpush1.msra.mxu0 0.0
        %1492 = vmatprep.subr.mxu0 0.0
        %1493 = vmatpush1.msra.mxu0 0.0
        %1494 = vmatprep.subr.mxu0 0.0
        %1495 = vmatpush1.msra.mxu0 0.0
        %1496 = vmatprep.subr.mxu0 0.0
        %1497 = vmatpush1.msra.mxu0 0.0
        %1498 = vmatprep.subr.mxu0 0.0
        %1499 = vmatpush1.msra.mxu0 0.0
        %1500 = vmatprep.subr.mxu0 0.0
        %1501 = vmatpush1.msra.mxu0 0.0
        %1502 = vmatprep.subr.mxu0 0.0
        %1503 = vmatpush1.msra.mxu0 0.0
        %1504 = vmatprep.subr.mxu0 0.0
        %1505 = vmatpush1.msra.mxu0 0.0
        %1506 = vmatprep.subr.mxu0 0.0
        %1507 = vmatpush1.msra.mxu0 0.0
        %1508 = vmatprep.subr.mxu0 0.0
        %1509 = vmatpush1.msra.mxu0 0.0
        %1510 = vmatprep.subr.mxu0 0.0
        %1511 = vmatpush1.msra.mxu0 0.0
        %1512 = vmatprep.subr.mxu0 0.0
        %1513 = vmatpush1.msra.mxu0 0.0
        %1514 = vmatprep.subr.mxu0 0.0
        %1515 = vmatpush1.msra.mxu0 0.0
        %1516 = vmatprep.subr.mxu0 0.0
        %1517 = vmatpush1.msra.mxu0 0.0
        %1518 = vmatprep.subr.mxu0 0.0
        %1519 = vmatpush1.msra.mxu0 0.0
        %1520 = vmatprep.subr.mxu0 0.0
        %1521 = vmatpush1.msra.mxu0 0.0
        %1522 = vmatprep.subr.mxu0 0.0
        %1523 = vmatpush1.msra.mxu0 0.0
        %1524 = vmatprep.subr.mxu0 0.0
        %1525 = vmatpush1.msra.mxu0 0.0
        %1526 = vmatprep.mubr.f32.mxu0 0.0
        %1527 = vmatmul.mubr.f32.gmra.mrb[0].mxu0 %v951
        %v1528 = vpop.f32.mrb[0].mxu0
        %v1529 = vadd.f32 %v1460, %v1528
        %v1530 = vpop.f32.mrb[0].mxu0
        %1531 = vdwg.mxu0
        %v1532 = vmul.f32 %v1363, %v1529
        %v1533 = vadd.f32 %v1448, %v1532
        %v1534 = vtanh.pop %v1533
        %v1535 = vsub.f32 1.0, %v1369
        %v1536 = vmul.f32 %v1535, %v1534
        %v1537 = vmul.f32 %v1369, %v792
        %v1538 = vadd.f32 %v1536, %v1537
        %v1539 = vxor.u32 %v1538, 2147483648
        %v1540 = vmul.f32 %v1539, 1.442695
        %v1541 = vpow.pop %v1540
        %v1542 = vadd.f32 %v1541, 1.0
        %v1543 = vrcp.pop %v1542
        %v1544 = vmul.f32 1.0, %v1543
        %v1545 = vmul.f32 %v1538, %v1544
        %1546 = vst.msk [vmem:[%s764] sm:$0xff] %vm949, %v1545
        %s1547 = sand.u32 %s449, 1
        %s1548 = scalar_lea.sflag [#allocation4], %s1547
        %s1549 = sand.u32 %s449, 1
        %s1550 = smul.addr %s1549, 8
        %s1551 = scalar_lea.vmem [#allocation17], %s1550
        // Predicated region
        $region125: #{tpu_custom_call.1} parent=87 // pred_check
          %p1552 = pneg %p459
        $region126: #{tpu_custom_call.1} parent=87 // pred_check_branch
          %1554 = sbr.rel (%p1552) target = $region128
        $region127: #{tpu_custom_call.1} parent=87 // pred_region
          %s1556 = ssub.s32 128, 128
          %1557 = vsyncadd %s1548, %s1556
          %s1558 = sadd.s32 %s45, %s44
          %s1559 = smul.addr %s43, 8
          %s1560 = sadd.s32 %s1558, %s1559
          %s1561 = smul.addr %s1560, 128
          %s1562 = scalar_lea.hbm %s17, %s1561
          %s1564 = sshll.u32 %s1551, 4
          %s1565 = int_to_ptr.vmem [resolvable:$true] %s1564
          %1567 = dma.vmem_to_hbm [thread:$0]  %s1565, 128, %s1562, %s1548
        $region128: #{tpu_custom_call.1} parent=87 // pred_fallthru
          _
      $region88: #{tpu_custom_call.1} parent=5 // pred_fallthru
        _
      %p1568 = scmp.le.s32.totalorder 2, %s33
      // Predicated region
      $region129: #{tpu_custom_call.1} parent=5 // pred_check
        %p1569 = pneg %p1568
      $region130: #{tpu_custom_call.1} parent=5 // pred_check_branch
        %1571 = sbr.rel (%p1569) target = $region132
      $region131: #{tpu_custom_call.1} parent=5 // pred_region
        %s1572 = ssub.s32 %s33, 2
        // Predicated region
        $region133: #{tpu_custom_call.1} parent=131 // pred_check
          %p1573 = pneg %p465
        $region134: #{tpu_custom_call.1} parent=131 // pred_check_branch
          %1575 = sbr.rel (%p1573) target = $region136
        $region135: #{tpu_custom_call.1} parent=131 // pred_region
          %s1576 = sand.u32 %s450, 1
          %s1577 = scalar_lea.sflag [#allocation4], %s1576
          %s1578 = sand.u32 %s450, 1
          %s1579 = smul.addr %s1578, 8
          %s1580 = scalar_lea.vmem [#allocation17], %s1579
          %1581 = dma.done %s1577, 128
        $region136: #{tpu_custom_call.1} parent=131 // pred_fallthru
          _
      $region132: #{tpu_custom_call.1} parent=5 // pred_fallthru
        _
    $region6: #{tpu_custom_call.1} parent=1 // loop_footer
      %s37 = sadd.s32 1, %s33
    $region7: #{tpu_custom_call.1} parent=1 // loop_footer_branch
      %32 = sbr.rel target = $region3
    $region8: #{tpu_custom_call.1} parent=1 // loop_exit
      _
    %1582 = vsyncpa [#allocation3], 1
    %s1583 = scalar_lea.sflag [#allocation3], 1
    %1584 = vsyncpa %s1583, 1
    %1585 = vsyncpa [#allocation6], 1
    %1586 = vsyncpa [#allocation9], 1
    %1587 = vsyncpa [#allocation12], 1
    %1588 = vsyncpa [#allocation15], 1
    %1589 = vsyncpa [#allocation4], 1
    %s1590 = scalar_lea.sflag [#allocation4], 1
    %1591 = vsyncpa %s1590, 1

</llo_original>
